<compile_context>
chip_gen: v7x
topology: tpu7x:2x2x1
jax: 0.10.0
libtpu: 0.0.40
codegen_flags: <defaults>
</compile_context>

<pallas_src>
import jax
import jax.numpy as jnp
from jax.experimental import pallas as pl
from jax.experimental.pallas import tpu as pltpu


def _round_up(n, m):
    return ((n + m - 1) // m) * m


def _pad_axis(a, axis, target):
    pad = target - a.shape[axis]
    if pad == 0:
        return a
    widths = [(0, 0)] * a.ndim
    widths[axis] = (0, pad)
    return jnp.pad(a, widths)


def deepxml_is_kernel(x_ref, w_enc_ref, b_enc_ref, w_t_ref, b_t_ref,
                      w_clf_ref, b_clf_ref, logits_ref, rep_ref):
    """One batch tile of the DeepXMLIS forward pass (dense classifier).

    x_ref:      [TB, Din]       bf16  dense document features
    w_enc_ref:  [Din, Drep]     bf16  encoder weight
    b_enc_ref:  [1, Drep]       f32   encoder bias
    w_t_ref:    [Drep, Drep]    bf16  doc-transform weight (residual block)
    b_t_ref:    [1, Drep]       f32   doc-transform bias
    w_clf_ref:  [Drep, Lp1]     bf16  classifier weight, pre-transposed once
    b_clf_ref:  [1, Lp1]        f32   classifier bias
    logits_ref: [TB, Lp1]       f32   dense logits over all labels (output)
    rep_ref:    [TB, Drep]      f32   document representation (output)
    """
    # ---- encoder.encode: relu(X @ W_enc + b_enc) -----------------------------
    h = jnp.maximum(
        jnp.dot(x_ref[...], w_enc_ref[...],
                preferred_element_type=jnp.float32) + b_enc_ref[...], 0.0)

    # ---- transform (doc): residual relu block ---------------------------------
    rep = jnp.maximum(
        jnp.dot(h.astype(jnp.bfloat16), w_t_ref[...],
                preferred_element_type=jnp.float32) + b_t_ref[...], 0.0) + h
    rep_ref[...] = rep

    # ---- classifier: dense logits over all labels (single MXU matmul) ---------
    # Shortlist column selection (F.embedding of SparseLinear) happens in the
    # wrapper on the [B, Lp1] result — far cheaper than pre-gathering B*S*Drep
    # weight rows through HBM.
    logits_ref[...] = (
        jnp.dot(rep.astype(jnp.bfloat16), w_clf_ref[...],
                preferred_element_type=jnp.float32) + b_clf_ref[...])


def deepxml_is_forward(x, y_s, params, *, tb=128):
    """DeepXMLIS.forward(batch_data) -> (shortlist logits, document rep).

    tb=128 suits v5e (4x128 MXU) and keeps megacore parallelism on v7x at
    small B; use tb=256 on v6e/v7x when cdiv(B, 256) >= 2.
    """
    B, Din = x.shape
    Drep = params["w_enc"].shape[1]
    Lp1 = params["clf_w"].shape[0]

    # Lane / MXU alignment: 128-pad feature/label dims, tile the batch.
    Din_p = _round_up(Din, 128)
    Drep_p = _round_up(Drep, 128)
    Lp1_p = _round_up(Lp1, 128)
    n_tiles = pl.cdiv(B, tb)
    B_p = n_tiles * tb

    # bf16 operands for the MXU; accumulation stays f32 inside the kernel.
    w_enc = _pad_axis(_pad_axis(params["w_enc"].astype(jnp.bfloat16), 0, Din_p), 1, Drep_p)
    b_enc = _pad_axis(params["b_enc"].astype(jnp.float32), 1, Drep_p)
    w_t = _pad_axis(_pad_axis(params["w_t"].astype(jnp.bfloat16), 0, Drep_p), 1, Drep_p)
    b_t = _pad_axis(params["b_t"].astype(jnp.float32), 1, Drep_p)
    # Classifier weight transposed ONCE per call (~128 KiB) so the kernel matmul
    # is a plain row-major [tb, Drep] x [Drep, Lp1] MXU dot; padded label rows
    # are zero so padded logit columns are exactly zero.
    w_clf_t = _pad_axis(_pad_axis(params["clf_w"].astype(jnp.bfloat16), 1, Drep_p), 0, Lp1_p).T
    b_clf = _pad_axis(params["clf_b"].astype(jnp.float32)[None, :], 1, Lp1_p)

    x_p = _pad_axis(_pad_axis(x.astype(jnp.bfloat16), 0, B_p), 1, Din_p)

    flops = 2 * B_p * (Din_p * Drep_p + Drep_p * Drep_p + Drep_p * Lp1_p)
    bytes_accessed = (x_p.size * 2
                      + w_enc.size * 2 + w_t.size * 2 + w_clf_t.size * 2
                      + b_enc.size * 4 + b_t.size * 4 + b_clf.size * 4
                      + B_p * Lp1_p * 4 + B_p * Drep_p * 4)

    out_shape = (jax.ShapeDtypeStruct((B_p, Lp1_p), jnp.float32),
                 jax.ShapeDtypeStruct((B_p, Drep_p), jnp.float32))

    dense_logits_p, rep_p = pl.pallas_call(
        deepxml_is_kernel,
        out_shape=out_shape,
        grid_spec=pltpu.PrefetchScalarGridSpec(
            num_scalar_prefetch=0,
            grid=(n_tiles,),
            in_specs=[
                pl.BlockSpec((tb, Din_p), lambda i: (i, 0)),         # X tile
                pl.BlockSpec((Din_p, Drep_p), lambda i: (0, 0)),     # W_enc (resident)
                pl.BlockSpec((1, Drep_p), lambda i: (0, 0)),         # b_enc
                pl.BlockSpec((Drep_p, Drep_p), lambda i: (0, 0)),    # W_t (resident)
                pl.BlockSpec((1, Drep_p), lambda i: (0, 0)),         # b_t
                pl.BlockSpec((Drep_p, Lp1_p), lambda i: (0, 0)),     # clf_W^T (resident)
                pl.BlockSpec((1, Lp1_p), lambda i: (0, 0)),          # clf_b
            ],
            out_specs=[
                pl.BlockSpec((tb, Lp1_p), lambda i: (i, 0)),         # dense logits
                pl.BlockSpec((tb, Drep_p), lambda i: (i, 0)),        # representation
            ],
        ),
        compiler_params=pltpu.CompilerParams(
            dimension_semantics=("parallel",),
            vmem_limit_bytes=32 * 1024 * 1024,
        ),
        cost_estimate=pl.CostEstimate(
            flops=int(flops), transcendentals=0,
            bytes_accessed=int(bytes_accessed)),
    )(x_p, w_enc, b_enc, w_t, b_t, w_clf_t, b_clf)

    # Padded batch rows (B..B_p) carry bias-driven garbage; valid only after
    # this slice. Shortlist selection = SparseLinear's F.embedding over Y_s.
    logits = jnp.take_along_axis(dense_logits_p[:B, :Lp1], y_s, axis=1)
    return logits, rep_p[:B, :Drep]


if __name__ == "__main__":
    # Batch is NOT a tile multiple (exercises the cdiv + pad tail path) and the
    # shortlist is NOT a lane multiple (irrelevant now that the shortlist select
    # happens in the wrapper, but kept for parity with the previous test).
    B, Din, Drep, S = 160, 256, 128, 48
    num_labels = 511
    label_padding_index = 511                 # offset +1 -> Lp1 classifier rows
    Lp1 = num_labels + 1

    key = jax.random.PRNGKey(0)
    k = jax.random.split(key, 8)
    x = jax.random.normal(k[0], (B, Din), jnp.float32)
    y_s = jax.random.randint(k[1], (B, S), 0, num_labels, dtype=jnp.int32)

    def scale(fan_in):
        return 1.0 / jnp.sqrt(jnp.float32(fan_in))

    w_enc = jax.random.normal(k[2], (Din, Drep), jnp.float32) * scale(Din)
    b_enc = jax.random.normal(k[3], (1, Drep), jnp.float32) * 0.01
    w_t = jax.random.normal(k[4], (Drep, Drep), jnp.float32) * scale(Drep)
    b_t = jax.random.normal(k[5], (1, Drep), jnp.float32) * 0.01
    clf_w = jax.random.normal(k[6], (Lp1, Drep), jnp.float32) * scale(Drep)
    clf_b = jax.random.normal(k[7], (Lp1,), jnp.float32) * 0.01
    # SparseLinear padding row contributes a zero logit
    clf_w = clf_w.at[label_padding_index].set(0.0)
    clf_b = clf_b.at[label_padding_index].set(0.0)

    params = dict(w_enc=w_enc, b_enc=b_enc, w_t=w_t, b_t=b_t,
                  clf_w=clf_w, clf_b=clf_b)

    logits, rep = deepxml_is_forward(x, y_s, params)
    jax.block_until_ready((logits, rep))

    # pure-JAX reference with the same bf16-operand / f32-accumulate contract
    bf = jnp.bfloat16
    h_ref = jnp.maximum(
        jnp.dot(x.astype(bf), w_enc.astype(bf),
                preferred_element_type=jnp.float32) + b_enc, 0.0)
    rep_ref = jnp.maximum(
        jnp.dot(h_ref.astype(bf), w_t.astype(bf),
                preferred_element_type=jnp.float32) + b_t, 0.0) + h_ref
    full_ref = jnp.dot(rep_ref.astype(bf), clf_w.astype(bf).T,
                       preferred_element_type=jnp.float32) + clf_b[None, :]
    logits_ref = jnp.take_along_axis(full_ref, y_s, axis=1)

    assert jnp.allclose(rep, rep_ref, atol=1e-3, rtol=1e-3)
    assert jnp.allclose(logits, logits_ref, atol=2e-2, rtol=2e-2)

    print("KERNEL_OK")
</pallas_src>

<mosaic_0001>
module attributes {stable_mosaic.version = 11 : i64} {
  func.func @deepxml_is_kernel(%arg0: i32, %arg1: memref<128x256xbf16, #tpu.memory_space<vmem>>, %arg2: memref<256x128xbf16, #tpu.memory_space<vmem>>, %arg3: memref<1x128xf32, #tpu.memory_space<vmem>>, %arg4: memref<128x128xbf16, #tpu.memory_space<vmem>>, %arg5: memref<1x128xf32, #tpu.memory_space<vmem>>, %arg6: memref<128x512xbf16, #tpu.memory_space<vmem>>, %arg7: memref<1x512xf32, #tpu.memory_space<vmem>>, %arg8: memref<128x512xf32, #tpu.memory_space<vmem>>, %arg9: memref<128x128xf32, #tpu.memory_space<vmem>>) attributes {dimension_semantics = [#tpu.dimension_semantics<parallel>], iteration_bounds = array<i64: 2>, scalar_prefetch = 0 : i64, scratch_operands = 0 : i64, tpu.core_type = #tpu.core_type<tc>, window_params = [{transform_indices = @transform_0, window_bounds = array<i64: 128, 256>}, {pipeline_mode = #tpu.pipeline_mode<synchronous>, transform_indices = @transform_1, window_bounds = array<i64: 256, 128>}, {pipeline_mode = #tpu.pipeline_mode<synchronous>, transform_indices = @transform_2, window_bounds = array<i64: 1, 128>}, {pipeline_mode = #tpu.pipeline_mode<synchronous>, transform_indices = @transform_3, window_bounds = array<i64: 128, 128>}, {pipeline_mode = #tpu.pipeline_mode<synchronous>, transform_indices = @transform_4, window_bounds = array<i64: 1, 128>}, {pipeline_mode = #tpu.pipeline_mode<synchronous>, transform_indices = @transform_5, window_bounds = array<i64: 128, 512>}, {pipeline_mode = #tpu.pipeline_mode<synchronous>, transform_indices = @transform_6, window_bounds = array<i64: 1, 512>}, {transform_indices = @transform_7, window_bounds = array<i64: 128, 512>}, {transform_indices = @transform_8, window_bounds = array<i64: 128, 128>}]} {
    %c0 = arith.constant 0 : index
    %c0_0 = arith.constant 0 : index
    %0 = vector.load %arg1[%c0, %c0_0] : memref<128x256xbf16, #tpu.memory_space<vmem>>, vector<128x256xbf16>
    %c0_1 = arith.constant 0 : index
    %c0_2 = arith.constant 0 : index
    %1 = vector.load %arg2[%c0_1, %c0_2] : memref<256x128xbf16, #tpu.memory_space<vmem>>, vector<256x128xbf16>
    %cst = arith.constant dense<0.000000e+00> : vector<128x128xf32>
    %2 = tpu.matmul %0, %1, %cst {dimension_numbers = #tpu.dot_dimension_numbers<[1], [0], [0], [1], [0, 0, 1, 1], [], []>} : vector<128x256xbf16>, vector<256x128xbf16>, vector<128x128xf32> -> vector<128x128xf32>
    %c0_3 = arith.constant 0 : index
    %c0_4 = arith.constant 0 : index
    %3 = vector.load %arg3[%c0_3, %c0_4] : memref<1x128xf32, #tpu.memory_space<vmem>>, vector<1x128xf32>
    %4 = vector.broadcast %3 : vector<1x128xf32> to vector<128x128xf32>
    %5 = arith.addf %2, %4 : vector<128x128xf32>
    %cst_5 = arith.constant 0.000000e+00 : f32
    %6 = vector.broadcast %cst_5 : f32 to vector<128x128xf32>
    %7 = arith.maximumf %5, %6 : vector<128x128xf32>
    %8 = arith.truncf %7 : vector<128x128xf32> to vector<128x128xbf16>
    %c0_6 = arith.constant 0 : index
    %c0_7 = arith.constant 0 : index
    %9 = vector.load %arg4[%c0_6, %c0_7] : memref<128x128xbf16, #tpu.memory_space<vmem>>, vector<128x128xbf16>
    %cst_8 = arith.constant dense<0.000000e+00> : vector<128x128xf32>
    %10 = tpu.matmul %8, %9, %cst_8 {dimension_numbers = #tpu.dot_dimension_numbers<[1], [0], [0], [1], [0, 0, 1, 1], [], []>} : vector<128x128xbf16>, vector<128x128xbf16>, vector<128x128xf32> -> vector<128x128xf32>
    %c0_9 = arith.constant 0 : index
    %c0_10 = arith.constant 0 : index
    %11 = vector.load %arg5[%c0_9, %c0_10] : memref<1x128xf32, #tpu.memory_space<vmem>>, vector<1x128xf32>
    %12 = vector.broadcast %11 : vector<1x128xf32> to vector<128x128xf32>
    %13 = arith.addf %10, %12 : vector<128x128xf32>
    %cst_11 = arith.constant 0.000000e+00 : f32
    %14 = vector.broadcast %cst_11 : f32 to vector<128x128xf32>
    %15 = arith.maximumf %13, %14 : vector<128x128xf32>
    %16 = arith.addf %15, %7 : vector<128x128xf32>
    %c0_12 = arith.constant 0 : index
    %c0_13 = arith.constant 0 : index
    %17 = vector.load %arg9[%c0_12, %c0_13] : memref<128x128xf32, #tpu.memory_space<vmem>>, vector<128x128xf32>
    tpu.vector_store %arg9[%c0_12, %c0_13], %16 {strides = array<i32>} : memref<128x128xf32, #tpu.memory_space<vmem>>, vector<128x128xf32>,
    %18 = arith.truncf %16 : vector<128x128xf32> to vector<128x128xbf16>
    %c0_14 = arith.constant 0 : index
    %c0_15 = arith.constant 0 : index
    %19 = vector.load %arg6[%c0_14, %c0_15] : memref<128x512xbf16, #tpu.memory_space<vmem>>, vector<128x512xbf16>
    %cst_16 = arith.constant dense<0.000000e+00> : vector<128x512xf32>
    %20 = tpu.matmul %18, %19, %cst_16 {dimension_numbers = #tpu.dot_dimension_numbers<[1], [0], [0], [1], [0, 0, 1, 1], [], []>} : vector<128x128xbf16>, vector<128x512xbf16>, vector<128x512xf32> -> vector<128x512xf32>
    %c0_17 = arith.constant 0 : index
    %c0_18 = arith.constant 0 : index
    %21 = vector.load %arg7[%c0_17, %c0_18] : memref<1x512xf32, #tpu.memory_space<vmem>>, vector<1x512xf32>
    %22 = vector.broadcast %21 : vector<1x512xf32> to vector<128x512xf32>
    %23 = arith.addf %20, %22 : vector<128x512xf32>
    %c0_19 = arith.constant 0 : index
    %c0_20 = arith.constant 0 : index
    %24 = vector.load %arg8[%c0_19, %c0_20] : memref<128x512xf32, #tpu.memory_space<vmem>>, vector<128x512xf32>
    tpu.vector_store %arg8[%c0_19, %c0_20], %23 {strides = array<i32>} : memref<128x512xf32, #tpu.memory_space<vmem>>, vector<128x512xf32>,
    return
  }
  func.func @transform_0(%arg0: i32) -> (i32, i32) {
    %c0_i32 = arith.constant 0 : i32
    %c0_i32_0 = arith.constant 0 : i32
    return %arg0, %c0_i32 : i32, i32
  }
  func.func @transform_1(%arg0: i32) -> (i32, i32) {
    %c0_i32 = arith.constant 0 : i32
    %c0_i32_0 = arith.constant 0 : i32
    %c0_i32_1 = arith.constant 0 : i32
    return %c0_i32, %c0_i32_0 : i32, i32
  }
  func.func @transform_2(%arg0: i32) -> (i32, i32) {
    %c0_i32 = arith.constant 0 : i32
    %c0_i32_0 = arith.constant 0 : i32
    %c0_i32_1 = arith.constant 0 : i32
    return %c0_i32, %c0_i32_0 : i32, i32
  }
  func.func @transform_3(%arg0: i32) -> (i32, i32) {
    %c0_i32 = arith.constant 0 : i32
    %c0_i32_0 = arith.constant 0 : i32
    %c0_i32_1 = arith.constant 0 : i32
    return %c0_i32, %c0_i32_0 : i32, i32
  }
  func.func @transform_4(%arg0: i32) -> (i32, i32) {
    %c0_i32 = arith.constant 0 : i32
    %c0_i32_0 = arith.constant 0 : i32
    %c0_i32_1 = arith.constant 0 : i32
    return %c0_i32, %c0_i32_0 : i32, i32
  }
  func.func @transform_5(%arg0: i32) -> (i32, i32) {
    %c0_i32 = arith.constant 0 : i32
    %c0_i32_0 = arith.constant 0 : i32
    %c0_i32_1 = arith.constant 0 : i32
    return %c0_i32, %c0_i32_0 : i32, i32
  }
  func.func @transform_6(%arg0: i32) -> (i32, i32) {
    %c0_i32 = arith.constant 0 : i32
    %c0_i32_0 = arith.constant 0 : i32
    %c0_i32_1 = arith.constant 0 : i32
    return %c0_i32, %c0_i32_0 : i32, i32
  }
  func.func @transform_7(%arg0: i32) -> (i32, i32) {
    %c0_i32 = arith.constant 0 : i32
    %c0_i32_0 = arith.constant 0 : i32
    return %arg0, %c0_i32 : i32, i32
  }
  func.func @transform_8(%arg0: i32) -> (i32, i32) {
    %c0_i32 = arith.constant 0 : i32
    %c0_i32_0 = arith.constant 0 : i32
    return %arg0, %c0_i32 : i32, i32
  }
}

</mosaic_0001>

<llo_original>
// kernel: tpu_custom_call.1
$region0: #{tpu_custom_call.1}
  #allocation0 [shape = 'u32[]', space=smem, size = 0x4, offset = 0x4, fixed_abs, tag = 'smem constant byte address 0x4 - core index']
  #allocation1 [shape = 'u32[144,128]{1,0:T(1,128)}', space=vmem, size = 0x12000, scoped, tag = 'internal scratch']
  %s0 = inlined_call_operand.hbm [shape: bf16[256,256], index: 0, kind: input, shape index: {}]
  %s1 = inlined_call_operand.hbm [shape: bf16[256,128], index: 1, kind: input, shape index: {}]
  %s2 = inlined_call_operand.vmem [shape: f32[1,128], index: 2, kind: input, shape index: {}]
  %s3 = inlined_call_operand.hbm [shape: bf16[128,128], index: 3, kind: input, shape index: {}]
  %s4 = inlined_call_operand.vmem [shape: f32[1,128], index: 4, kind: input, shape index: {}]
  %s5 = inlined_call_operand.hbm [shape: bf16[128,512], index: 5, kind: input, shape index: {}]
  %s6 = inlined_call_operand.vmem [shape: f32[1,512], index: 6, kind: input, shape index: {}]
  %s7 = inlined_call_operand.hbm [shape: f32[256,512], index: 7, kind: output, shape index: {0}]
  %s8 = inlined_call_operand.hbm [shape: f32[256,128], index: 8, kind: output, shape index: {1}]
  %9 = xla_tuple %s7, %s8
  %s10 = sld [smem:[#allocation0]]
  $region85: #{tpu_custom_call.1} parent=0
    _
  %s12 = ssub.s32 1, %s10
  %s13 = scalar_select 0, %s12, %s10
  $region1: #{tpu_custom_call.1} parent=0
    #allocation2 [shape = 'u8[131072]{0}', space=vmem, size = 0x20000, scoped, tag = 'input window, operand 0']
    #allocation3 [shape = 's32[2]{0}', space=sflag, size = 0x8, scoped, tag = 'scoped memory for tpu_custom_call.1']
    #allocation4 [shape = 's32[2]{0}', space=sflag, size = 0x8, scoped, tag = 'scoped memory for tpu_custom_call.1']
    #allocation5 [shape = 'u8[65536]{0}', space=vmem, size = 0x10000, scoped, tag = 'input window, operand 1, single buffered']
    #allocation6 [shape = 's32[1]{0}', space=sflag, size = 0x4, scoped, tag = 'scoped memory for tpu_custom_call.1']
    #allocation7 [shape = 'u8[32768]{0}', space=vmem, size = 0x8000, scoped, tag = 'input window, operand 3, single buffered']
    #allocation8 [shape = 'u8[131072]{0}', space=vmem, size = 0x20000, scoped, tag = 'input window, operand 5, single buffered']
    #allocation9 [shape = 's32[1]{0}', space=sflag, size = 0x4, scoped, tag = 'scoped memory for tpu_custom_call.1']
    #allocation10 [shape = 'u8[524288]{0}', space=vmem, size = 0x80000, scoped, tag = 'output window, operand 0']
    #allocation11 [shape = 'u8[131072]{0}', space=vmem, size = 0x20000, scoped, tag = 'output window, operand 1']
    #allocation12 [shape = 's32[2]{0}', space=sflag, size = 0x8, scoped, tag = 'scoped memory for tpu_custom_call.1']
    %14 = vsyncpa [#allocation3], 0
    %s15 = scalar_lea.sflag [#allocation3], 1
    %16 = vsyncpa %s15, 0
    %17 = vsyncpa [#allocation6], 0
    %18 = vsyncpa [#allocation9], 0
    %19 = vsyncpa [#allocation4], 0
    %s20 = scalar_lea.sflag [#allocation4], 1
    %21 = vsyncpa %s20, 0
    %22 = vsyncpa [#allocation12], 0
    %s23 = scalar_lea.sflag [#allocation12], 1
    %24 = vsyncpa %s23, 0
    loop: start=0, step=1, limit=4
    $region2: #{tpu_custom_call.1} parent=1 // loop_pre_header
      _
    $region3: #{tpu_custom_call.1} parent=1 // loop_header
      %s26 = sphi 0, %s30
      %p27 = scmp.ge.s32.totalorder %s26, 4
      %s36 = sphi 0, %s38
      %s39 = sphi 0, %s36
      %s40 = sphi 0, %s39
      %s56 = sphi 0, %s40
      %s60 = sphi 0, %s60
      %s62 = sphi 0, %s60
      %s63 = sphi 0, %s62
      %s77 = sphi 0, %s63
      %s81 = sphi 0, %s81
      %s83 = sphi 0, %s81
      %s84 = sphi 0, %s83
      %s98 = sphi 0, %s84
      %s102 = sphi 0, %s102
      %s104 = sphi 0, %s102
      %s105 = sphi 0, %s104
      %s119 = sphi 0, %s105
      %s123 = sphi 0, %s123
      %s125 = sphi 0, %s123
      %s126 = sphi 0, %s125
      %s140 = sphi 0, %s126
      %s144 = sphi 0, %s144
      %s146 = sphi 0, %s144
      %s147 = sphi 0, %s146
      %s161 = sphi 0, %s147
      %s165 = sphi 0, %s165
      %s167 = sphi 0, %s165
      %s168 = sphi 0, %s167
      %s182 = sphi 0, %s168
      %s188 = sphi 0, %s190
      %s191 = sphi 0, %s188
      %s192 = sphi 0, %s191
      %s208 = sphi 0, %s192
      %s214 = sphi 0, %s216
      %s217 = sphi 0, %s214
      %s218 = sphi 0, %s217
      %s234 = sphi 0, %s218
    $region4: #{tpu_custom_call.1} parent=1 // loop_header_branch
      %29 = sbr.rel (%p27) target = $region8
    $region5: #{tpu_custom_call.1} parent=1 // loop_body
      %s31 = ssub.s32 %s26, 1
      %s32 = ssub.s32 %s26, 2
      %s33 = sadd.s32 %s26, 1
      %s34 = ssub.s32 %s26, %s33
      %p35 = scmp.eq.s32.totalorder %s34, 0
      %s37 = sadd.s32 %s36, 1
      %s38 = scalar_select %p35, %s36, %s37
      %p41 = pneg %p35
      %p42 = scmp.eq.s32.totalorder %s26, 1
      %p43 = por %p41, %p42
      %p44 = scmp.ne.s32.totalorder %s36, %s39
      %p45 = scmp.eq.s32.totalorder %s26, 0
      %p46 = por %p44, %p45
      %p47 = scmp.ne.s32.totalorder %s36, %s39
      %p48 = scmp.eq.s32.totalorder %s31, 1
      %p49 = por %p47, %p48
      %p50 = scmp.ne.s32.totalorder %s39, %s40
      %p51 = scmp.eq.s32.totalorder %s31, 0
      %p52 = por %p50, %p51
      %p53 = scmp.ne.s32.totalorder %s39, %s40
      %p54 = scmp.eq.s32.totalorder %s32, 1
      %p55 = por %p53, %p54
      %p57 = scmp.ne.s32.totalorder %s40, %s56
      %p58 = scmp.eq.s32.totalorder %s32, 0
      %p59 = por %p57, %p58
      %s61 = sadd.s32 %s60, 1
      %p64 = scmp.eq.s32.totalorder %s26, 1
      %p65 = scmp.ne.s32.totalorder %s60, %s62
      %p66 = scmp.eq.s32.totalorder %s26, 0
      %p67 = por %p65, %p66
      %p68 = scmp.ne.s32.totalorder %s60, %s62
      %p69 = scmp.eq.s32.totalorder %s31, 1
      %p70 = por %p68, %p69
      %p71 = scmp.ne.s32.totalorder %s62, %s63
      %p72 = scmp.eq.s32.totalorder %s31, 0
      %p73 = por %p71, %p72
      %p74 = scmp.ne.s32.totalorder %s62, %s63
      %p75 = scmp.eq.s32.totalorder %s32, 1
      %p76 = por %p74, %p75
      %p78 = scmp.ne.s32.totalorder %s63, %s77
      %p79 = scmp.eq.s32.totalorder %s32, 0
      %p80 = por %p78, %p79
      %s82 = sadd.s32 %s81, 1
      %p85 = scmp.eq.s32.totalorder %s26, 1
      %p86 = scmp.ne.s32.totalorder %s81, %s83
      %p87 = scmp.eq.s32.totalorder %s26, 0
      %p88 = por %p86, %p87
      %p89 = scmp.ne.s32.totalorder %s81, %s83
      %p90 = scmp.eq.s32.totalorder %s31, 1
      %p91 = por %p89, %p90
      %p92 = scmp.ne.s32.totalorder %s83, %s84
      %p93 = scmp.eq.s32.totalorder %s31, 0
      %p94 = por %p92, %p93
      %p95 = scmp.ne.s32.totalorder %s83, %s84
      %p96 = scmp.eq.s32.totalorder %s32, 1
      %p97 = por %p95, %p96
      %p99 = scmp.ne.s32.totalorder %s84, %s98
      %p100 = scmp.eq.s32.totalorder %s32, 0
      %p101 = por %p99, %p100
      %s103 = sadd.s32 %s102, 1
      %p106 = scmp.eq.s32.totalorder %s26, 1
      %p107 = scmp.ne.s32.totalorder %s102, %s104
      %p108 = scmp.eq.s32.totalorder %s26, 0
      %p109 = por %p107, %p108
      %p110 = scmp.ne.s32.totalorder %s102, %s104
      %p111 = scmp.eq.s32.totalorder %s31, 1
      %p112 = por %p110, %p111
      %p113 = scmp.ne.s32.totalorder %s104, %s105
      %p114 = scmp.eq.s32.totalorder %s31, 0
      %p115 = por %p113, %p114
      %p116 = scmp.ne.s32.totalorder %s104, %s105
      %p117 = scmp.eq.s32.totalorder %s32, 1
      %p118 = por %p116, %p117
      %p120 = scmp.ne.s32.totalorder %s105, %s119
      %p121 = scmp.eq.s32.totalorder %s32, 0
      %p122 = por %p120, %p121
      %s124 = sadd.s32 %s123, 1
      %p127 = scmp.eq.s32.totalorder %s26, 1
      %p128 = scmp.ne.s32.totalorder %s123, %s125
      %p129 = scmp.eq.s32.totalorder %s26, 0
      %p130 = por %p128, %p129
      %p131 = scmp.ne.s32.totalorder %s123, %s125
      %p132 = scmp.eq.s32.totalorder %s31, 1
      %p133 = por %p131, %p132
      %p134 = scmp.ne.s32.totalorder %s125, %s126
      %p135 = scmp.eq.s32.totalorder %s31, 0
      %p136 = por %p134, %p135
      %p137 = scmp.ne.s32.totalorder %s125, %s126
      %p138 = scmp.eq.s32.totalorder %s32, 1
      %p139 = por %p137, %p138
      %p141 = scmp.ne.s32.totalorder %s126, %s140
      %p142 = scmp.eq.s32.totalorder %s32, 0
      %p143 = por %p141, %p142
      %s145 = sadd.s32 %s144, 1
      %p148 = scmp.eq.s32.totalorder %s26, 1
      %p149 = scmp.ne.s32.totalorder %s144, %s146
      %p150 = scmp.eq.s32.totalorder %s26, 0
      %p151 = por %p149, %p150
      %p152 = scmp.ne.s32.totalorder %s144, %s146
      %p153 = scmp.eq.s32.totalorder %s31, 1
      %p154 = por %p152, %p153
      %p155 = scmp.ne.s32.totalorder %s146, %s147
      %p156 = scmp.eq.s32.totalorder %s31, 0
      %p157 = por %p155, %p156
      %p158 = scmp.ne.s32.totalorder %s146, %s147
      %p159 = scmp.eq.s32.totalorder %s32, 1
      %p160 = por %p158, %p159
      %p162 = scmp.ne.s32.totalorder %s147, %s161
      %p163 = scmp.eq.s32.totalorder %s32, 0
      %p164 = por %p162, %p163
      %s166 = sadd.s32 %s165, 1
      %p169 = scmp.eq.s32.totalorder %s26, 1
      %p170 = scmp.ne.s32.totalorder %s165, %s167
      %p171 = scmp.eq.s32.totalorder %s26, 0
      %p172 = por %p170, %p171
      %p173 = scmp.ne.s32.totalorder %s165, %s167
      %p174 = scmp.eq.s32.totalorder %s31, 1
      %p175 = por %p173, %p174
      %p176 = scmp.ne.s32.totalorder %s167, %s168
      %p177 = scmp.eq.s32.totalorder %s31, 0
      %p178 = por %p176, %p177
      %p179 = scmp.ne.s32.totalorder %s167, %s168
      %p180 = scmp.eq.s32.totalorder %s32, 1
      %p181 = por %p179, %p180
      %p183 = scmp.ne.s32.totalorder %s168, %s182
      %p184 = scmp.eq.s32.totalorder %s32, 0
      %p185 = por %p183, %p184
      %s186 = ssub.s32 %s26, %s33
      %p187 = scmp.eq.s32.totalorder %s186, 0
      %s189 = sadd.s32 %s188, 1
      %s190 = scalar_select %p187, %s188, %s189
      %p193 = pneg %p187
      %p194 = scmp.eq.s32.totalorder %s26, 1
      %p195 = por %p193, %p194
      %p196 = scmp.ne.s32.totalorder %s188, %s191
      %p197 = scmp.eq.s32.totalorder %s26, 0
      %p198 = por %p196, %p197
      %p199 = scmp.ne.s32.totalorder %s188, %s191
      %p200 = scmp.eq.s32.totalorder %s31, 1
      %p201 = por %p199, %p200
      %p202 = scmp.ne.s32.totalorder %s191, %s192
      %p203 = scmp.eq.s32.totalorder %s31, 0
      %p204 = por %p202, %p203
      %p205 = scmp.ne.s32.totalorder %s191, %s192
      %p206 = scmp.eq.s32.totalorder %s32, 1
      %p207 = por %p205, %p206
      %p209 = scmp.ne.s32.totalorder %s192, %s208
      %p210 = scmp.eq.s32.totalorder %s32, 0
      %p211 = por %p209, %p210
      %s212 = ssub.s32 %s26, %s33
      %p213 = scmp.eq.s32.totalorder %s212, 0
      %s215 = sadd.s32 %s214, 1
      %s216 = scalar_select %p213, %s214, %s215
      %p219 = pneg %p213
      %p220 = scmp.eq.s32.totalorder %s26, 1
      %p221 = por %p219, %p220
      %p222 = scmp.ne.s32.totalorder %s214, %s217
      %p223 = scmp.eq.s32.totalorder %s26, 0
      %p224 = por %p222, %p223
      %p225 = scmp.ne.s32.totalorder %s214, %s217
      %p226 = scmp.eq.s32.totalorder %s31, 1
      %p227 = por %p225, %p226
      %p228 = scmp.ne.s32.totalorder %s217, %s218
      %p229 = scmp.eq.s32.totalorder %s31, 0
      %p230 = por %p228, %p229
      %p231 = scmp.ne.s32.totalorder %s217, %s218
      %p232 = scmp.eq.s32.totalorder %s32, 1
      %p233 = por %p231, %p232
      %p235 = scmp.ne.s32.totalorder %s218, %s234
      %p236 = scmp.eq.s32.totalorder %s32, 0
      %p237 = por %p235, %p236
      %p238 = scmp.le.s32.totalorder 1, %s26
      %p239 = scmp.lt.s32.totalorder %s26, 3
      %p240 = pnand %p238, %p239
      %p241 = pneg %p240
      // Predicated region
      $region9: #{tpu_custom_call.1} parent=5 // pred_check
        _
      $region10: #{tpu_custom_call.1} parent=5 // pred_check_branch
        %243 = sbr.rel (%p240) target = $region12
      $region11: #{tpu_custom_call.1} parent=5 // pred_region
        %s244 = ssub.s32 %s26, 1
        // Predicated region
        $region13: #{tpu_custom_call.1} parent=11 // pred_check
          %p245 = pneg %p73
        $region14: #{tpu_custom_call.1} parent=11 // pred_check_branch
          %247 = sbr.rel (%p245) target = $region16
        $region15: #{tpu_custom_call.1} parent=11 // pred_region
          %s249 = ssub.s32 2048, 2048
          %250 = vsyncadd [#allocation6], %s249
          %s251 = sshll.u32 [#allocation5], 4
          %s252 = int_to_ptr.vmem [resolvable:$true] %s251
          %257 = dma.hbm_to_vmem [thread:$0]  %s1, 2048, %s252, [#allocation6], 64, 64, 4
        $region16: #{tpu_custom_call.1} parent=11 // pred_fallthru
          _
        // Predicated region
        $region17: #{tpu_custom_call.1} parent=11 // pred_check
          %p258 = pneg %p94
        $region18: #{tpu_custom_call.1} parent=11 // pred_check_branch
          %260 = sbr.rel (%p258) target = $region20
        $region19: #{tpu_custom_call.1} parent=11 // pred_region
          _
        $region20: #{tpu_custom_call.1} parent=11 // pred_fallthru
          _
        // Predicated region
        $region21: #{tpu_custom_call.1} parent=11 // pred_check
          %p261 = pneg %p115
        $region22: #{tpu_custom_call.1} parent=11 // pred_check_branch
          %263 = sbr.rel (%p261) target = $region24
        $region23: #{tpu_custom_call.1} parent=11 // pred_region
          %s265 = ssub.s32 1024, 1024
          %266 = vsyncadd [#allocation6], %s265
          %s267 = sshll.u32 [#allocation7], 4
          %s268 = int_to_ptr.vmem [resolvable:$true] %s267
          %273 = dma.hbm_to_vmem [thread:$0]  %s3, 1024, %s268, [#allocation6], 64, 64, 4
        $region24: #{tpu_custom_call.1} parent=11 // pred_fallthru
          _
        // Predicated region
        $region25: #{tpu_custom_call.1} parent=11 // pred_check
          %p274 = pneg %p136
        $region26: #{tpu_custom_call.1} parent=11 // pred_check_branch
          %276 = sbr.rel (%p274) target = $region28
        $region27: #{tpu_custom_call.1} parent=11 // pred_region
          _
        $region28: #{tpu_custom_call.1} parent=11 // pred_fallthru
          _
        // Predicated region
        $region29: #{tpu_custom_call.1} parent=11 // pred_check
          %p277 = pneg %p157
        $region30: #{tpu_custom_call.1} parent=11 // pred_check_branch
          %279 = sbr.rel (%p277) target = $region32
        $region31: #{tpu_custom_call.1} parent=11 // pred_region
          %s281 = ssub.s32 4096, 4096
          %282 = vsyncadd [#allocation9], %s281
          %s283 = sshll.u32 [#allocation8], 4
          %s284 = int_to_ptr.vmem [resolvable:$true] %s283
          %289 = dma.hbm_to_vmem [thread:$0]  %s5, 4096, %s284, [#allocation9], 256, 256, 16
        $region32: #{tpu_custom_call.1} parent=11 // pred_fallthru
          _
        // Predicated region
        $region33: #{tpu_custom_call.1} parent=11 // pred_check
          %p290 = pneg %p178
        $region34: #{tpu_custom_call.1} parent=11 // pred_check_branch
          %292 = sbr.rel (%p290) target = $region36
        $region35: #{tpu_custom_call.1} parent=11 // pred_region
          _
        $region36: #{tpu_custom_call.1} parent=11 // pred_fallthru
          _
      $region12: #{tpu_custom_call.1} parent=5 // pred_fallthru
        _
      %p293 = scmp.lt.s32.totalorder %s26, 2
      // Predicated region
      $region37: #{tpu_custom_call.1} parent=5 // pred_check
        %p294 = pneg %p293
      $region38: #{tpu_custom_call.1} parent=5 // pred_check_branch
        %296 = sbr.rel (%p294) target = $region40
      $region39: #{tpu_custom_call.1} parent=5 // pred_region
        // Predicated region
        $region41: #{tpu_custom_call.1} parent=39 // pred_check
          %p297 = pneg %p46
        $region42: #{tpu_custom_call.1} parent=39 // pred_check_branch
          %299 = sbr.rel (%p297) target = $region44
        $region43: #{tpu_custom_call.1} parent=39 // pred_region
          %s300 = sand.u32 %s36, 1
          %s301 = scalar_lea.sflag [#allocation3], %s300
          %s302 = sand.u32 %s36, 1
          %s303 = smul.addr %s302, 128
          %s304 = scalar_lea.vmem [#allocation2], %s303
          %s305 = smul.u32 16, %s26
          %s307 = ssub.s32 2048, 2048
          %308 = vsyncadd %s301, %s307
          %s309 = smul.addr %s305, 2
          %s310 = smul.addr %s309, 64
          %s311 = scalar_lea.hbm %s0, %s310
          %s312 = sshll.u32 %s304, 4
          %s313 = int_to_ptr.vmem [resolvable:$true] %s312
          %318 = dma.hbm_to_vmem [thread:$0]  %s311, 2048, %s313, %s301, 128, 128, 8
        $region44: #{tpu_custom_call.1} parent=39 // pred_fallthru
          _
      $region40: #{tpu_custom_call.1} parent=5 // pred_fallthru
        _
      %p319 = scmp.le.s32.totalorder 1, %s26
      %p320 = scmp.lt.s32.totalorder %s26, 3
      %p321 = pnand %p319, %p320
      %p322 = pneg %p321
      // Predicated region
      $region45: #{tpu_custom_call.1} parent=5 // pred_check
        _
      $region46: #{tpu_custom_call.1} parent=5 // pred_check_branch
        %324 = sbr.rel (%p321) target = $region48
      $region47: #{tpu_custom_call.1} parent=5 // pred_region
        %s325 = ssub.s32 %s26, 1
        %s326 = sand.u32 %s39, 1
        %s327 = scalar_lea.sflag [#allocation3], %s326
        %s328 = sand.u32 %s39, 1
        %s329 = smul.addr %s328, 128
        %s330 = scalar_lea.vmem [#allocation2], %s329
        // Predicated region
        $region49: #{tpu_custom_call.1} parent=47 // pred_check
          %p331 = pneg %p52
        $region50: #{tpu_custom_call.1} parent=47 // pred_check_branch
          %333 = sbr.rel (%p331) target = $region52
        $region51: #{tpu_custom_call.1} parent=47 // pred_region
          %334 = dma.done %s327, 2048
        $region52: #{tpu_custom_call.1} parent=47 // pred_fallthru
          _
        // Predicated region
        $region53: #{tpu_custom_call.1} parent=47 // pred_check
          %p335 = pneg %p73
        $region54: #{tpu_custom_call.1} parent=47 // pred_check_branch
          %337 = sbr.rel (%p335) target = $region56
        $region55: #{tpu_custom_call.1} parent=47 // pred_region
          %338 = dma.done [#allocation6], 2048
        $region56: #{tpu_custom_call.1} parent=47 // pred_fallthru
          _
        // Predicated region
        $region57: #{tpu_custom_call.1} parent=47 // pred_check
          %p339 = pneg %p115
        $region58: #{tpu_custom_call.1} parent=47 // pred_check_branch
          %341 = sbr.rel (%p339) target = $region60
        $region59: #{tpu_custom_call.1} parent=47 // pred_region
          %342 = dma.done [#allocation6], 1024
        $region60: #{tpu_custom_call.1} parent=47 // pred_fallthru
          _
        // Predicated region
        $region61: #{tpu_custom_call.1} parent=47 // pred_check
          %p343 = pneg %p157
        $region62: #{tpu_custom_call.1} parent=47 // pred_check_branch
          %345 = sbr.rel (%p343) target = $region64
        $region63: #{tpu_custom_call.1} parent=47 // pred_region
          %346 = dma.done [#allocation9], 4096
        $region64: #{tpu_custom_call.1} parent=47 // pred_fallthru
          _
        %s347 = sand.u32 %s39, 1
        %s348 = scalar_lea.sflag [#allocation3], %s347
        %s349 = sand.u32 %s39, 1
        %s350 = smul.addr %s349, 128
        %s351 = scalar_lea.vmem [#allocation2], %s350
        %p352 = pneg %p52
        %p353 = pneg %p49
        %p354 = pneg %p73
        %p355 = pneg %p70
        %p356 = pneg %p94
        %p357 = pneg %p91
        %p358 = pneg %p115
        %p359 = pneg %p112
        %p360 = pneg %p136
        %p361 = pneg %p133
        %p362 = pneg %p157
        %p363 = pneg %p154
        %p364 = pneg %p178
        %p365 = pneg %p175
        %p366 = pneg %p204
        %p367 = pneg %p201
        %s368 = sand.u32 %s191, 1
        %s369 = scalar_lea.sflag [#allocation4], %s368
        %s370 = sand.u32 %s191, 1
        %s371 = smul.addr %s370, 512
        %s372 = scalar_lea.vmem [#allocation10], %s371
        %p373 = pneg %p230
        %p374 = pneg %p227
        %s375 = sand.u32 %s217, 1
        %s376 = scalar_lea.sflag [#allocation12], %s375
        %s377 = sand.u32 %s217, 1
        %s378 = smul.addr %s377, 128
        %s379 = scalar_lea.vmem [#allocation11], %s378
        %s380 = smul.u32 16, %s31
        %s381 = smul.u32 16, %s31
        %s382 = smul.u32 16, %s31
        %v384 = vld [vmem:[%s330] sm:$0xff]
        %v385 = vld [vmem:[%s330 + $0x8] sm:$0xff]
        %v386 = vld [vmem:[%s330 + $0x10] sm:$0xff]
        %v387 = vld [vmem:[%s330 + $0x18] sm:$0xff]
        %v388 = vld [vmem:[%s330 + $0x20] sm:$0xff]
        %v389 = vld [vmem:[%s330 + $0x28] sm:$0xff]
        %v390 = vld [vmem:[%s330 + $0x30] sm:$0xff]
        %v391 = vld [vmem:[%s330 + $0x38] sm:$0xff]
        %v392 = vld [vmem:[%s330 + $0x40] sm:$0xff]
        %v393 = vld [vmem:[%s330 + $0x48] sm:$0xff]
        %v394 = vld [vmem:[%s330 + $0x50] sm:$0xff]
        %v395 = vld [vmem:[%s330 + $0x58] sm:$0xff]
        %v396 = vld [vmem:[%s330 + $0x60] sm:$0xff]
        %v397 = vld [vmem:[%s330 + $0x68] sm:$0xff]
        %v398 = vld [vmem:[%s330 + $0x70] sm:$0xff]
        %v399 = vld [vmem:[%s330 + $0x78] sm:$0xff]
        %v400 = vld [vmem:[#allocation5] sm:$0xf]
        %v401 = vld [vmem:[#allocation5 + $0x4] sm:$0xf]
        %v402 = vld [vmem:[#allocation5 + $0x8] sm:$0xf]
        %v403 = vld [vmem:[#allocation5 + $0xc] sm:$0xf]
        %v404 = vld [vmem:[#allocation5 + $0x10] sm:$0xf]
        %v405 = vld [vmem:[#allocation5 + $0x14] sm:$0xf]
        %v406 = vld [vmem:[#allocation5 + $0x18] sm:$0xf]
        %v407 = vld [vmem:[#allocation5 + $0x1c] sm:$0xf]
        %v408 = vld [vmem:[#allocation5 + $0x20] sm:$0xf]
        %v409 = vld [vmem:[#allocation5 + $0x24] sm:$0xf]
        %v410 = vld [vmem:[#allocation5 + $0x28] sm:$0xf]
        %v411 = vld [vmem:[#allocation5 + $0x2c] sm:$0xf]
        %v412 = vld [vmem:[#allocation5 + $0x30] sm:$0xf]
        %v413 = vld [vmem:[#allocation5 + $0x34] sm:$0xf]
        %v414 = vld [vmem:[#allocation5 + $0x38] sm:$0xf]
        %v415 = vld [vmem:[#allocation5 + $0x3c] sm:$0xf]
        %v416 = vld [vmem:[#allocation5 + $0x40] sm:$0xf]
        %v417 = vld [vmem:[#allocation5 + $0x44] sm:$0xf]
        %v418 = vld [vmem:[#allocation5 + $0x48] sm:$0xf]
        %v419 = vld [vmem:[#allocation5 + $0x4c] sm:$0xf]
        %v420 = vld [vmem:[#allocation5 + $0x50] sm:$0xf]
        %v421 = vld [vmem:[#allocation5 + $0x54] sm:$0xf]
        %v422 = vld [vmem:[#allocation5 + $0x58] sm:$0xf]
        %v423 = vld [vmem:[#allocation5 + $0x5c] sm:$0xf]
        %v424 = vld [vmem:[#allocation5 + $0x60] sm:$0xf]
        %v425 = vld [vmem:[#allocation5 + $0x64] sm:$0xf]
        %v426 = vld [vmem:[#allocation5 + $0x68] sm:$0xf]
        %v427 = vld [vmem:[#allocation5 + $0x6c] sm:$0xf]
        %v428 = vld [vmem:[#allocation5 + $0x70] sm:$0xf]
        %v429 = vld [vmem:[#allocation5 + $0x74] sm:$0xf]
        %v430 = vld [vmem:[#allocation5 + $0x78] sm:$0xf]
        %v431 = vld [vmem:[#allocation5 + $0x7c] sm:$0xf]
        %v432 = vld [vmem:[%s2] sm:$0x1]
        %v434 = vlaneseq
        %v435 = vshrl.u32 %v434, 7
        %v436 = vsub.s32 0, %v435
        %v437 = vrot.slane %v432, %v436
        %v455 = vunpack.c.l.b16 %v384
        %v456 = vunpack.c.h.b16 %v384
        %v457 = vunpack.c.l.b16 %v385
        %v458 = vunpack.c.h.b16 %v385
        %v459 = vunpack.c.l.b16 %v386
        %v460 = vunpack.c.h.b16 %v386
        %v461 = vunpack.c.l.b16 %v387
        %v462 = vunpack.c.h.b16 %v387
        %v463 = vunpack.c.l.b16 %v388
        %v464 = vunpack.c.h.b16 %v388
        %v465 = vunpack.c.l.b16 %v389
        %v466 = vunpack.c.h.b16 %v389
        %v467 = vunpack.c.l.b16 %v390
        %v468 = vunpack.c.h.b16 %v390
        %v469 = vunpack.c.l.b16 %v391
        %v470 = vunpack.c.h.b16 %v391
        %v471 = vunpack.c.l.b16 %v392
        %v472 = vunpack.c.h.b16 %v392
        %v473 = vunpack.c.l.b16 %v393
        %v474 = vunpack.c.h.b16 %v393
        %v475 = vunpack.c.l.b16 %v394
        %v476 = vunpack.c.h.b16 %v394
        %v477 = vunpack.c.l.b16 %v395
        %v478 = vunpack.c.h.b16 %v395
        %v479 = vunpack.c.l.b16 %v396
        %v480 = vunpack.c.h.b16 %v396
        %v481 = vunpack.c.l.b16 %v397
        %v482 = vunpack.c.h.b16 %v397
        %v483 = vunpack.c.l.b16 %v398
        %v484 = vunpack.c.h.b16 %v398
        %v485 = vunpack.c.l.b16 %v399
        %v486 = vunpack.c.h.b16 %v399
        %v487 = vpack.c.b16 %v457, %v455
        %v488 = vpack.c.b16 %v458, %v456
        %v489 = vpack.c.b16 %v461, %v459
        %v490 = vpack.c.b16 %v462, %v460
        %v491 = vpack.c.b16 %v465, %v463
        %v492 = vpack.c.b16 %v466, %v464
        %v493 = vpack.c.b16 %v469, %v467
        %v494 = vpack.c.b16 %v470, %v468
        %v495 = vpack.c.b16 %v473, %v471
        %v496 = vpack.c.b16 %v474, %v472
        %v497 = vpack.c.b16 %v477, %v475
        %v498 = vpack.c.b16 %v478, %v476
        %v499 = vpack.c.b16 %v481, %v479
        %v500 = vpack.c.b16 %v482, %v480
        %v501 = vpack.c.b16 %v485, %v483
        %v502 = vpack.c.b16 %v486, %v484
        %v551 = vunpack.c.l.b16 %v400
        %v552 = vunpack.c.l.b16 %v401
        %v553 = vunpack.c.l.b16 %v402
        %v554 = vunpack.c.l.b16 %v403
        %v555 = vunpack.c.l.b16 %v404
        %v556 = vunpack.c.l.b16 %v405
        %v557 = vunpack.c.l.b16 %v406
        %v558 = vunpack.c.l.b16 %v407
        %v559 = vunpack.c.l.b16 %v408
        %v560 = vunpack.c.l.b16 %v409
        %v561 = vunpack.c.l.b16 %v410
        %v562 = vunpack.c.l.b16 %v411
        %v563 = vunpack.c.l.b16 %v412
        %v564 = vunpack.c.l.b16 %v413
        %v565 = vunpack.c.l.b16 %v414
        %v566 = vunpack.c.l.b16 %v415
        %v567 = vunpack.c.l.b16 %v416
        %v568 = vunpack.c.l.b16 %v417
        %v569 = vunpack.c.l.b16 %v418
        %v570 = vunpack.c.l.b16 %v419
        %v571 = vunpack.c.l.b16 %v420
        %v572 = vunpack.c.l.b16 %v421
        %v573 = vunpack.c.l.b16 %v422
        %v574 = vunpack.c.l.b16 %v423
        %v575 = vunpack.c.l.b16 %v424
        %v576 = vunpack.c.l.b16 %v425
        %v577 = vunpack.c.l.b16 %v426
        %v578 = vunpack.c.l.b16 %v427
        %v579 = vunpack.c.l.b16 %v428
        %v580 = vunpack.c.l.b16 %v429
        %v581 = vunpack.c.l.b16 %v430
        %v582 = vunpack.c.l.b16 %v431
        %v583 = vpack.c.b16 %v552, %v551
        %v584 = vpack.c.b16 %v554, %v553
        %v585 = vpack.c.b16 %v556, %v555
        %v586 = vpack.c.b16 %v558, %v557
        %v587 = vpack.c.b16 %v560, %v559
        %v588 = vpack.c.b16 %v562, %v561
        %v589 = vpack.c.b16 %v564, %v563
        %v590 = vpack.c.b16 %v566, %v565
        %v591 = vpack.c.b16 %v568, %v567
        %v592 = vpack.c.b16 %v570, %v569
        %v593 = vpack.c.b16 %v572, %v571
        %v594 = vpack.c.b16 %v574, %v573
        %v595 = vpack.c.b16 %v576, %v575
        %v596 = vpack.c.b16 %v578, %v577
        %v597 = vpack.c.b16 %v580, %v579
        %v598 = vpack.c.b16 %v582, %v581
        %615 = vmatprep.subr.bf16.mxu0 0
        %616 = vmatpush1.bf16.msra.mxu0 %v583
        %617 = vmatprep.subr.bf16.mxu0 0
        %618 = vmatpush1.bf16.msra.mxu0 %v584
        %619 = vmatprep.subr.bf16.mxu0 0
        %620 = vmatpush1.bf16.msra.mxu0 %v585
        %621 = vmatprep.subr.bf16.mxu0 0
        %622 = vmatpush1.bf16.msra.mxu0 %v586
        %623 = vmatprep.subr.bf16.mxu0 0
        %624 = vmatpush1.bf16.msra.mxu0 %v587
        %625 = vmatprep.subr.bf16.mxu0 0
        %626 = vmatpush1.bf16.msra.mxu0 %v588
        %627 = vmatprep.subr.bf16.mxu0 0
        %628 = vmatpush1.bf16.msra.mxu0 %v589
        %629 = vmatprep.subr.bf16.mxu0 0
        %630 = vmatpush1.bf16.msra.mxu0 %v590
        %631 = vmatprep.subr.bf16.mxu0 0
        %632 = vmatpush1.bf16.msra.mxu0 %v591
        %633 = vmatprep.subr.bf16.mxu0 0
        %634 = vmatpush1.bf16.msra.mxu0 %v592
        %635 = vmatprep.subr.bf16.mxu0 0
        %636 = vmatpush1.bf16.msra.mxu0 %v593
        %637 = vmatprep.subr.bf16.mxu0 0
        %638 = vmatpush1.bf16.msra.mxu0 %v594
        %639 = vmatprep.subr.bf16.mxu0 0
        %640 = vmatpush1.bf16.msra.mxu0 %v595
        %641 = vmatprep.subr.bf16.mxu0 0
        %642 = vmatpush1.bf16.msra.mxu0 %v596
        %643 = vmatprep.subr.bf16.mxu0 0
        %644 = vmatpush1.bf16.msra.mxu0 %v597
        %645 = vmatprep.subr.bf16.mxu0 0
        %646 = vmatpush1.bf16.msra.mxu0 %v598
        %647 = vmatprep.mubr.bf16.mxu0 %v488
        %648 = vmatmul.mubr.bf16.gmra.mrb[0].mxu0 %v487
        %v649 = vpop.f32.mrb[0].mxu0
        %v650 = vadd.f32 %v437, %v649
        %v651 = vpop.f32.mrb[0].mxu0
        %v652 = vpop.f32.mrb[0].mxu0
        %v653 = vadd.f32 %v437, %v652
        %v654 = vpop.f32.mrb[0].mxu0
        %655 = vmatprep.mubr.bf16.mxu0 %v490
        %656 = vmatmul.mubr.bf16.gmra.mrb[0].mxu0 %v489
        %v657 = vpop.f32.mrb[0].mxu0
        %v658 = vadd.f32 %v437, %v657
        %v659 = vpop.f32.mrb[0].mxu0
        %v660 = vpop.f32.mrb[0].mxu0
        %v661 = vadd.f32 %v437, %v660
        %v662 = vpop.f32.mrb[0].mxu0
        %663 = vmatprep.mubr.bf16.mxu0 %v492
        %664 = vmatmul.mubr.bf16.gmra.mrb[0].mxu0 %v491
        %v665 = vpop.f32.mrb[0].mxu0
        %v666 = vadd.f32 %v437, %v665
        %v667 = vpop.f32.mrb[0].mxu0
        %v668 = vpop.f32.mrb[0].mxu0
        %v669 = vadd.f32 %v437, %v668
        %v670 = vpop.f32.mrb[0].mxu0
        %671 = vmatprep.mubr.bf16.mxu0 %v494
        %672 = vmatmul.mubr.bf16.gmra.mrb[0].mxu0 %v493
        %v673 = vpop.f32.mrb[0].mxu0
        %v674 = vadd.f32 %v437, %v673
        %v675 = vpop.f32.mrb[0].mxu0
        %v676 = vpop.f32.mrb[0].mxu0
        %v677 = vadd.f32 %v437, %v676
        %v678 = vpop.f32.mrb[0].mxu0
        %679 = vmatprep.mubr.bf16.mxu0 %v496
        %680 = vmatmul.mubr.bf16.gmra.mrb[0].mxu0 %v495
        %v681 = vpop.f32.mrb[0].mxu0
        %v682 = vadd.f32 %v437, %v681
        %v683 = vpop.f32.mrb[0].mxu0
        %v684 = vpop.f32.mrb[0].mxu0
        %v685 = vadd.f32 %v437, %v684
        %v686 = vpop.f32.mrb[0].mxu0
        %687 = vmatprep.mubr.bf16.mxu0 %v498
        %688 = vmatmul.mubr.bf16.gmra.mrb[0].mxu0 %v497
        %v689 = vpop.f32.mrb[0].mxu0
        %v690 = vadd.f32 %v437, %v689
        %v691 = vpop.f32.mrb[0].mxu0
        %v692 = vpop.f32.mrb[0].mxu0
        %v693 = vadd.f32 %v437, %v692
        %v694 = vpop.f32.mrb[0].mxu0
        %695 = vmatprep.mubr.bf16.mxu0 %v500
        %696 = vmatmul.mubr.bf16.gmra.mrb[0].mxu0 %v499
        %v697 = vpop.f32.mrb[0].mxu0
        %v698 = vadd.f32 %v437, %v697
        %v699 = vpop.f32.mrb[0].mxu0
        %v700 = vpop.f32.mrb[0].mxu0
        %v701 = vadd.f32 %v437, %v700
        %v702 = vpop.f32.mrb[0].mxu0
        %703 = vmatprep.mubr.bf16.mxu0 %v502
        %704 = vmatmul.mubr.bf16.gmra.mrb[0].mxu0 %v501
        %v705 = vpop.f32.mrb[0].mxu0
        %v706 = vadd.f32 %v437, %v705
        %v707 = vpop.f32.mrb[0].mxu0
        %v708 = vpop.f32.mrb[0].mxu0
        %v709 = vadd.f32 %v437, %v708
        %v710 = vpop.f32.mrb[0].mxu0
        %711 = vdwg.mxu0
        %v712 = vmax.f32 %v650, 0.0
        %v713 = vmax.f32 %v653, 0.0
        %v714 = vmax.f32 %v658, 0.0
        %v715 = vmax.f32 %v661, 0.0
        %v716 = vmax.f32 %v666, 0.0
        %v717 = vmax.f32 %v669, 0.0
        %v718 = vmax.f32 %v674, 0.0
        %v719 = vmax.f32 %v677, 0.0
        %v720 = vmax.f32 %v682, 0.0
        %v721 = vmax.f32 %v685, 0.0
        %v722 = vmax.f32 %v690, 0.0
        %v723 = vmax.f32 %v693, 0.0
        %v724 = vmax.f32 %v698, 0.0
        %v725 = vmax.f32 %v701, 0.0
        %v726 = vmax.f32 %v706, 0.0
        %v727 = vmax.f32 %v709, 0.0
        %v728 = vpack.c.bf16 %v713, %v712
        %v729 = vpack.c.bf16 %v715, %v714
        %v730 = vpack.c.bf16 %v717, %v716
        %v731 = vpack.c.bf16 %v719, %v718
        %v732 = vpack.c.bf16 %v721, %v720
        %v733 = vpack.c.bf16 %v723, %v722
        %v734 = vpack.c.bf16 %v725, %v724
        %v735 = vpack.c.bf16 %v727, %v726
        %v736 = vld [vmem:[#allocation7] sm:$0xf]
        %v737 = vld [vmem:[#allocation7 + $0x4] sm:$0xf]
        %v738 = vld [vmem:[#allocation7 + $0x8] sm:$0xf]
        %v739 = vld [vmem:[#allocation7 + $0xc] sm:$0xf]
        %v740 = vld [vmem:[#allocation7 + $0x10] sm:$0xf]
        %v741 = vld [vmem:[#allocation7 + $0x14] sm:$0xf]
        %v742 = vld [vmem:[#allocation7 + $0x18] sm:$0xf]
        %v743 = vld [vmem:[#allocation7 + $0x1c] sm:$0xf]
        %v744 = vld [vmem:[#allocation7 + $0x20] sm:$0xf]
        %v745 = vld [vmem:[#allocation7 + $0x24] sm:$0xf]
        %v746 = vld [vmem:[#allocation7 + $0x28] sm:$0xf]
        %v747 = vld [vmem:[#allocation7 + $0x2c] sm:$0xf]
        %v748 = vld [vmem:[#allocation7 + $0x30] sm:$0xf]
        %v749 = vld [vmem:[#allocation7 + $0x34] sm:$0xf]
        %v750 = vld [vmem:[#allocation7 + $0x38] sm:$0xf]
        %v751 = vld [vmem:[#allocation7 + $0x3c] sm:$0xf]
        %v752 = vld [vmem:[%s4] sm:$0x1]
        %v754 = vlaneseq
        %v755 = vshrl.u32 %v754, 7
        %v756 = vsub.s32 0, %v755
        %v757 = vrot.slane %v752, %v756
        %v775 = vunpack.c.l.b16 %v736
        %v776 = vunpack.c.l.b16 %v737
        %v777 = vunpack.c.l.b16 %v738
        %v778 = vunpack.c.l.b16 %v739
        %v779 = vunpack.c.l.b16 %v740
        %v780 = vunpack.c.l.b16 %v741
        %v781 = vunpack.c.l.b16 %v742
        %v782 = vunpack.c.l.b16 %v743
        %v783 = vunpack.c.l.b16 %v744
        %v784 = vunpack.c.l.b16 %v745
        %v785 = vunpack.c.l.b16 %v746
        %v786 = vunpack.c.l.b16 %v747
        %v787 = vunpack.c.l.b16 %v748
        %v788 = vunpack.c.l.b16 %v749
        %v789 = vunpack.c.l.b16 %v750
        %v790 = vunpack.c.l.b16 %v751
        %v791 = vpack.c.b16 %v776, %v775
        %v792 = vpack.c.b16 %v778, %v777
        %v793 = vpack.c.b16 %v780, %v779
        %v794 = vpack.c.b16 %v782, %v781
        %v795 = vpack.c.b16 %v784, %v783
        %v796 = vpack.c.b16 %v786, %v785
        %v797 = vpack.c.b16 %v788, %v787
        %v798 = vpack.c.b16 %v790, %v789
        %807 = vmatprep.subr.bf16.mxu0 0
        %808 = vmatpush1.bf16.msra.mxu0 %v791
        %809 = vmatprep.subr.bf16.mxu0 0
        %810 = vmatpush1.bf16.msra.mxu0 %v792
        %811 = vmatprep.subr.bf16.mxu0 0
        %812 = vmatpush1.bf16.msra.mxu0 %v793
        %813 = vmatprep.subr.bf16.mxu0 0
        %814 = vmatpush1.bf16.msra.mxu0 %v794
        %815 = vmatprep.subr.bf16.mxu0 0
        %816 = vmatpush1.bf16.msra.mxu0 %v795
        %817 = vmatprep.subr.bf16.mxu0 0
        %818 = vmatpush1.bf16.msra.mxu0 %v796
        %819 = vmatprep.subr.bf16.mxu0 0
        %820 = vmatpush1.bf16.msra.mxu0 %v797
        %821 = vmatprep.subr.bf16.mxu0 0
        %822 = vmatpush1.bf16.msra.mxu0 %v798
        %823 = vmatprep.subr.bf16.mxu0 0
        %824 = vmatpush1.bf16.msra.mxu0 0
        %825 = vmatprep.subr.bf16.mxu0 0
        %826 = vmatpush1.bf16.msra.mxu0 0
        %827 = vmatprep.subr.bf16.mxu0 0
        %828 = vmatpush1.bf16.msra.mxu0 0
        %829 = vmatprep.subr.bf16.mxu0 0
        %830 = vmatpush1.bf16.msra.mxu0 0
        %831 = vmatprep.subr.bf16.mxu0 0
        %832 = vmatpush1.bf16.msra.mxu0 0
        %833 = vmatprep.subr.bf16.mxu0 0
        %834 = vmatpush1.bf16.msra.mxu0 0
        %835 = vmatprep.subr.bf16.mxu0 0
        %836 = vmatpush1.bf16.msra.mxu0 0
        %837 = vmatprep.subr.bf16.mxu0 0
        %838 = vmatpush1.bf16.msra.mxu0 0
        %839 = vmatprep.mubr.bf16.mxu0 0
        %840 = vmatmul.mubr.bf16.gmra.mrb[0].mxu0 %v728
        %v841 = vpop.f32.mrb[0].mxu0
        %v842 = vadd.f32 %v757, %v841
        %v843 = vpop.f32.mrb[0].mxu0
        %v844 = vpop.f32.mrb[0].mxu0
        %v845 = vadd.f32 %v757, %v844
        %v846 = vpop.f32.mrb[0].mxu0
        %847 = vmatprep.mubr.bf16.mxu0 0
        %848 = vmatmul.mubr.bf16.gmra.mrb[0].mxu0 %v729
        %v849 = vpop.f32.mrb[0].mxu0
        %v850 = vadd.f32 %v757, %v849
        %v851 = vpop.f32.mrb[0].mxu0
        %v852 = vpop.f32.mrb[0].mxu0
        %v853 = vadd.f32 %v757, %v852
        %v854 = vpop.f32.mrb[0].mxu0
        %855 = vmatprep.mubr.bf16.mxu0 0
        %856 = vmatmul.mubr.bf16.gmra.mrb[0].mxu0 %v730
        %v857 = vpop.f32.mrb[0].mxu0
        %v858 = vadd.f32 %v757, %v857
        %v859 = vpop.f32.mrb[0].mxu0
        %v860 = vpop.f32.mrb[0].mxu0
        %v861 = vadd.f32 %v757, %v860
        %v862 = vpop.f32.mrb[0].mxu0
        %863 = vmatprep.mubr.bf16.mxu0 0
        %864 = vmatmul.mubr.bf16.gmra.mrb[0].mxu0 %v731
        %v865 = vpop.f32.mrb[0].mxu0
        %v866 = vadd.f32 %v757, %v865
        %v867 = vpop.f32.mrb[0].mxu0
        %v868 = vpop.f32.mrb[0].mxu0
        %v869 = vadd.f32 %v757, %v868
        %v870 = vpop.f32.mrb[0].mxu0
        %871 = vmatprep.mubr.bf16.mxu0 0
        %872 = vmatmul.mubr.bf16.gmra.mrb[0].mxu0 %v732
        %v873 = vpop.f32.mrb[0].mxu0
        %v874 = vadd.f32 %v757, %v873
        %v875 = vpop.f32.mrb[0].mxu0
        %v876 = vpop.f32.mrb[0].mxu0
        %v877 = vadd.f32 %v757, %v876
        %v878 = vpop.f32.mrb[0].mxu0
        %879 = vmatprep.mubr.bf16.mxu0 0
        %880 = vmatmul.mubr.bf16.gmra.mrb[0].mxu0 %v733
        %v881 = vpop.f32.mrb[0].mxu0
        %v882 = vadd.f32 %v757, %v881
        %v883 = vpop.f32.mrb[0].mxu0
        %v884 = vpop.f32.mrb[0].mxu0
        %v885 = vadd.f32 %v757, %v884
        %v886 = vpop.f32.mrb[0].mxu0
        %887 = vmatprep.mubr.bf16.mxu0 0
        %888 = vmatmul.mubr.bf16.gmra.mrb[0].mxu0 %v734
        %v889 = vpop.f32.mrb[0].mxu0
        %v890 = vadd.f32 %v757, %v889
        %v891 = vpop.f32.mrb[0].mxu0
        %v892 = vpop.f32.mrb[0].mxu0
        %v893 = vadd.f32 %v757, %v892
        %v894 = vpop.f32.mrb[0].mxu0
        %895 = vmatprep.mubr.bf16.mxu0 0
        %896 = vmatmul.mubr.bf16.gmra.mrb[0].mxu0 %v735
        %v897 = vpop.f32.mrb[0].mxu0
        %v898 = vadd.f32 %v757, %v897
        %v899 = vpop.f32.mrb[0].mxu0
        %v900 = vpop.f32.mrb[0].mxu0
        %v901 = vadd.f32 %v757, %v900
        %v902 = vpop.f32.mrb[0].mxu0
        %903 = vdwg.mxu0
        %v904 = vmax.f32 %v842, 0.0
        %v905 = vmax.f32 %v845, 0.0
        %v906 = vmax.f32 %v850, 0.0
        %v907 = vmax.f32 %v853, 0.0
        %v908 = vmax.f32 %v858, 0.0
        %v909 = vmax.f32 %v861, 0.0
        %v910 = vmax.f32 %v866, 0.0
        %v911 = vmax.f32 %v869, 0.0
        %v912 = vmax.f32 %v874, 0.0
        %v913 = vmax.f32 %v877, 0.0
        %v914 = vmax.f32 %v882, 0.0
        %v915 = vmax.f32 %v885, 0.0
        %v916 = vmax.f32 %v890, 0.0
        %v917 = vmax.f32 %v893, 0.0
        %v918 = vmax.f32 %v898, 0.0
        %v919 = vmax.f32 %v901, 0.0
        %v920 = vadd.f32 %v904, %v712
        %v921 = vadd.f32 %v905, %v713
        %v922 = vadd.f32 %v906, %v714
        %v923 = vadd.f32 %v907, %v715
        %v924 = vadd.f32 %v908, %v716
        %v925 = vadd.f32 %v909, %v717
        %v926 = vadd.f32 %v910, %v718
        %v927 = vadd.f32 %v911, %v719
        %v928 = vadd.f32 %v912, %v720
        %v929 = vadd.f32 %v913, %v721
        %v930 = vadd.f32 %v914, %v722
        %v931 = vadd.f32 %v915, %v723
        %v932 = vadd.f32 %v916, %v724
        %v933 = vadd.f32 %v917, %v725
        %v934 = vadd.f32 %v918, %v726
        %v935 = vadd.f32 %v919, %v727
        %936 = vst [vmem:[%s379] sm:$0xff] %v920
        %937 = vst [vmem:[%s379 + $0x8] sm:$0xff] %v921
        %938 = vst [vmem:[%s379 + $0x10] sm:$0xff] %v922
        %939 = vst [vmem:[%s379 + $0x18] sm:$0xff] %v923
        %940 = vst [vmem:[%s379 + $0x20] sm:$0xff] %v924
        %941 = vst [vmem:[%s379 + $0x28] sm:$0xff] %v925
        %942 = vst [vmem:[%s379 + $0x30] sm:$0xff] %v926
        %943 = vst [vmem:[%s379 + $0x38] sm:$0xff] %v927
        %944 = vst [vmem:[%s379 + $0x40] sm:$0xff] %v928
        %945 = vst [vmem:[%s379 + $0x48] sm:$0xff] %v929
        %946 = vst [vmem:[%s379 + $0x50] sm:$0xff] %v930
        %947 = vst [vmem:[%s379 + $0x58] sm:$0xff] %v931
        %948 = vst [vmem:[%s379 + $0x60] sm:$0xff] %v932
        %949 = vst [vmem:[%s379 + $0x68] sm:$0xff] %v933
        %950 = vst [vmem:[%s379 + $0x70] sm:$0xff] %v934
        %951 = vst [vmem:[%s379 + $0x78] sm:$0xff] %v935
        %v952 = vpack.c.bf16 %v921, %v920
        %v953 = vpack.c.bf16 %v923, %v922
        %v954 = vpack.c.bf16 %v925, %v924
        %v955 = vpack.c.bf16 %v927, %v926
        %v956 = vpack.c.bf16 %v929, %v928
        %v957 = vpack.c.bf16 %v931, %v930
        %v958 = vpack.c.bf16 %v933, %v932
        %v959 = vpack.c.bf16 %v935, %v934
        %v960 = vld [vmem:[#allocation8] sm:$0xff]
        %v961 = vld [vmem:[#allocation8 + $0x8] sm:$0xff]
        %v962 = vld [vmem:[#allocation8 + $0x10] sm:$0xff]
        %v963 = vld [vmem:[#allocation8 + $0x18] sm:$0xff]
        %v964 = vld [vmem:[#allocation8 + $0x20] sm:$0xff]
        %v965 = vld [vmem:[#allocation8 + $0x28] sm:$0xff]
        %v966 = vld [vmem:[#allocation8 + $0x30] sm:$0xff]
        %v967 = vld [vmem:[#allocation8 + $0x38] sm:$0xff]
        %v968 = vld [vmem:[#allocation8 + $0x40] sm:$0xff]
        %v969 = vld [vmem:[#allocation8 + $0x48] sm:$0xff]
        %v970 = vld [vmem:[#allocation8 + $0x50] sm:$0xff]
        %v971 = vld [vmem:[#allocation8 + $0x58] sm:$0xff]
        %v972 = vld [vmem:[#allocation8 + $0x60] sm:$0xff]
        %v973 = vld [vmem:[#allocation8 + $0x68] sm:$0xff]
        %v974 = vld [vmem:[#allocation8 + $0x70] sm:$0xff]
        %v975 = vld [vmem:[#allocation8 + $0x78] sm:$0xff]
        %v976 = vld [vmem:[#allocation8 + $0x80] sm:$0xff]
        %v977 = vld [vmem:[#allocation8 + $0x88] sm:$0xff]
        %v978 = vld [vmem:[#allocation8 + $0x90] sm:$0xff]
        %v979 = vld [vmem:[#allocation8 + $0x98] sm:$0xff]
        %v980 = vld [vmem:[#allocation8 + $0xa0] sm:$0xff]
        %v981 = vld [vmem:[#allocation8 + $0xa8] sm:$0xff]
        %v982 = vld [vmem:[#allocation8 + $0xb0] sm:$0xff]
        %v983 = vld [vmem:[#allocation8 + $0xb8] sm:$0xff]
        %v984 = vld [vmem:[#allocation8 + $0xc0] sm:$0xff]
        %v985 = vld [vmem:[#allocation8 + $0xc8] sm:$0xff]
        %v986 = vld [vmem:[#allocation8 + $0xd0] sm:$0xff]
        %v987 = vld [vmem:[#allocation8 + $0xd8] sm:$0xff]
        %v988 = vld [vmem:[#allocation8 + $0xe0] sm:$0xff]
        %v989 = vld [vmem:[#allocation8 + $0xe8] sm:$0xff]
        %v990 = vld [vmem:[#allocation8 + $0xf0] sm:$0xff]
        %v991 = vld [vmem:[#allocation8 + $0xf8] sm:$0xff]
        %v992 = vld [vmem:[%s6] sm:$0xf]
        %v994 = vlaneseq
        %v995 = vshrl.u32 %v994, 7
        %v996 = vsub.s32 0, %v995
        %v997 = vrot.slane %v992, %v996
        %v998 = vlaneseq
        %v999 = vshrl.u32 %v998, 7
        %v1000 = vsub.s32 1, %v999
        %v1001 = vrot.slane %v992, %v1000
        %v1002 = vlaneseq
        %v1003 = vshrl.u32 %v1002, 7
        %v1004 = vsub.s32 2, %v1003
        %v1005 = vrot.slane %v992, %v1004
        %v1006 = vlaneseq
        %v1007 = vshrl.u32 %v1006, 7
        %v1008 = vsub.s32 3, %v1007
        %v1009 = vrot.slane %v992, %v1008
        %v1046 = vunpack.c.l.b16 %v960
        %v1047 = vunpack.c.h.b16 %v960
        %v1048 = vunpack.c.l.b16 %v961
        %v1049 = vunpack.c.h.b16 %v961
        %v1050 = vunpack.c.l.b16 %v962
        %v1051 = vunpack.c.h.b16 %v962
        %v1052 = vunpack.c.l.b16 %v963
        %v1053 = vunpack.c.h.b16 %v963
        %v1054 = vunpack.c.l.b16 %v964
        %v1055 = vunpack.c.h.b16 %v964
        %v1056 = vunpack.c.l.b16 %v965
        %v1057 = vunpack.c.h.b16 %v965
        %v1058 = vunpack.c.l.b16 %v966
        %v1059 = vunpack.c.h.b16 %v966
        %v1060 = vunpack.c.l.b16 %v967
        %v1061 = vunpack.c.h.b16 %v967
        %v1062 = vunpack.c.l.b16 %v968
        %v1063 = vunpack.c.h.b16 %v968
        %v1064 = vunpack.c.l.b16 %v969
        %v1065 = vunpack.c.h.b16 %v969
        %v1066 = vunpack.c.l.b16 %v970
        %v1067 = vunpack.c.h.b16 %v970
        %v1068 = vunpack.c.l.b16 %v971
        %v1069 = vunpack.c.h.b16 %v971
        %v1070 = vunpack.c.l.b16 %v972
        %v1071 = vunpack.c.h.b16 %v972
        %v1072 = vunpack.c.l.b16 %v973
        %v1073 = vunpack.c.h.b16 %v973
        %v1074 = vunpack.c.l.b16 %v974
        %v1075 = vunpack.c.h.b16 %v974
        %v1076 = vunpack.c.l.b16 %v975
        %v1077 = vunpack.c.h.b16 %v975
        %v1078 = vunpack.c.l.b16 %v976
        %v1079 = vunpack.c.h.b16 %v976
        %v1080 = vunpack.c.l.b16 %v977
        %v1081 = vunpack.c.h.b16 %v977
        %v1082 = vunpack.c.l.b16 %v978
        %v1083 = vunpack.c.h.b16 %v978
        %v1084 = vunpack.c.l.b16 %v979
        %v1085 = vunpack.c.h.b16 %v979
        %v1086 = vunpack.c.l.b16 %v980
        %v1087 = vunpack.c.h.b16 %v980
        %v1088 = vunpack.c.l.b16 %v981
        %v1089 = vunpack.c.h.b16 %v981
        %v1090 = vunpack.c.l.b16 %v982
        %v1091 = vunpack.c.h.b16 %v982
        %v1092 = vunpack.c.l.b16 %v983
        %v1093 = vunpack.c.h.b16 %v983
        %v1094 = vunpack.c.l.b16 %v984
        %v1095 = vunpack.c.h.b16 %v984
        %v1096 = vunpack.c.l.b16 %v985
        %v1097 = vunpack.c.h.b16 %v985
        %v1098 = vunpack.c.l.b16 %v986
        %v1099 = vunpack.c.h.b16 %v986
        %v1100 = vunpack.c.l.b16 %v987
        %v1101 = vunpack.c.h.b16 %v987
        %v1102 = vunpack.c.l.b16 %v988
        %v1103 = vunpack.c.h.b16 %v988
        %v1104 = vunpack.c.l.b16 %v989
        %v1105 = vunpack.c.h.b16 %v989
        %v1106 = vunpack.c.l.b16 %v990
        %v1107 = vunpack.c.h.b16 %v990
        %v1108 = vunpack.c.l.b16 %v991
        %v1109 = vunpack.c.h.b16 %v991
        %v1110 = vpack.c.b16 %v1050, %v1046
        %v1111 = vpack.c.b16 %v1051, %v1047
        %v1112 = vpack.c.b16 %v1052, %v1048
        %v1113 = vpack.c.b16 %v1053, %v1049
        %v1114 = vpack.c.b16 %v1058, %v1054
        %v1115 = vpack.c.b16 %v1059, %v1055
        %v1116 = vpack.c.b16 %v1060, %v1056
        %v1117 = vpack.c.b16 %v1061, %v1057
        %v1118 = vpack.c.b16 %v1066, %v1062
        %v1119 = vpack.c.b16 %v1067, %v1063
        %v1120 = vpack.c.b16 %v1068, %v1064
        %v1121 = vpack.c.b16 %v1069, %v1065
        %v1122 = vpack.c.b16 %v1074, %v1070
        %v1123 = vpack.c.b16 %v1075, %v1071
        %v1124 = vpack.c.b16 %v1076, %v1072
        %v1125 = vpack.c.b16 %v1077, %v1073
        %v1126 = vpack.c.b16 %v1082, %v1078
        %v1127 = vpack.c.b16 %v1083, %v1079
        %v1128 = vpack.c.b16 %v1084, %v1080
        %v1129 = vpack.c.b16 %v1085, %v1081
        %v1130 = vpack.c.b16 %v1090, %v1086
        %v1131 = vpack.c.b16 %v1091, %v1087
        %v1132 = vpack.c.b16 %v1092, %v1088
        %v1133 = vpack.c.b16 %v1093, %v1089
        %v1134 = vpack.c.b16 %v1098, %v1094
        %v1135 = vpack.c.b16 %v1099, %v1095
        %v1136 = vpack.c.b16 %v1100, %v1096
        %v1137 = vpack.c.b16 %v1101, %v1097
        %v1138 = vpack.c.b16 %v1106, %v1102
        %v1139 = vpack.c.b16 %v1107, %v1103
        %v1140 = vpack.c.b16 %v1108, %v1104
        %v1141 = vpack.c.b16 %v1109, %v1105
        %1174 = vmatprep.subr.bf16.mxu0 %v1111
        %1175 = vmatpush1.bf16.msra.mxu0 %v1110
        %1176 = vmatprep.subr.bf16.mxu0 %v1115
        %1177 = vmatpush1.bf16.msra.mxu0 %v1114
        %1178 = vmatprep.subr.bf16.mxu0 %v1119
        %1179 = vmatpush1.bf16.msra.mxu0 %v1118
        %1180 = vmatprep.subr.bf16.mxu0 %v1123
        %1181 = vmatpush1.bf16.msra.mxu0 %v1122
        %1182 = vmatprep.subr.bf16.mxu0 %v1127
        %1183 = vmatpush1.bf16.msra.mxu0 %v1126
        %1184 = vmatprep.subr.bf16.mxu0 %v1131
        %1185 = vmatpush1.bf16.msra.mxu0 %v1130
        %1186 = vmatprep.subr.bf16.mxu0 %v1135
        %1187 = vmatpush1.bf16.msra.mxu0 %v1134
        %1188 = vmatprep.subr.bf16.mxu0 %v1139
        %1189 = vmatpush1.bf16.msra.mxu0 %v1138
        %1190 = vmatprep.subr.bf16.mxu0 0
        %1191 = vmatpush1.bf16.msra.mxu0 0
        %1192 = vmatprep.subr.bf16.mxu0 0
        %1193 = vmatpush1.bf16.msra.mxu0 0
        %1194 = vmatprep.subr.bf16.mxu0 0
        %1195 = vmatpush1.bf16.msra.mxu0 0
        %1196 = vmatprep.subr.bf16.mxu0 0
        %1197 = vmatpush1.bf16.msra.mxu0 0
        %1198 = vmatprep.subr.bf16.mxu0 0
        %1199 = vmatpush1.bf16.msra.mxu0 0
        %1200 = vmatprep.subr.bf16.mxu0 0
        %1201 = vmatpush1.bf16.msra.mxu0 0
        %1202 = vmatprep.subr.bf16.mxu0 0
        %1203 = vmatpush1.bf16.msra.mxu0 0
        %1204 = vmatprep.subr.bf16.mxu0 0
        %1205 = vmatpush1.bf16.msra.mxu0 0
        %1206 = vmatprep.mubr.bf16.mxu0 0
        %1207 = vmatmul.mubr.bf16.gmra.mrb[0].mxu0 %v952
        %v1208 = vpop.f32.mrb[0].mxu0
        %v1209 = vadd.f32 %v997, %v1208
        %v1210 = vpop.f32.mrb[0].mxu0
        %v1211 = vadd.f32 %v1001, %v1210
        %v1212 = vpop.f32.mrb[0].mxu0
        %v1213 = vadd.f32 %v997, %v1212
        %v1214 = vpop.f32.mrb[0].mxu0
        %v1215 = vadd.f32 %v1001, %v1214
        %1216 = vmatprep.mubr.bf16.mxu0 0
        %1217 = vmatmul.mubr.bf16.gmra.mrb[0].mxu0 %v953
        %v1218 = vpop.f32.mrb[0].mxu0
        %v1219 = vadd.f32 %v997, %v1218
        %v1220 = vpop.f32.mrb[0].mxu0
        %v1221 = vadd.f32 %v1001, %v1220
        %v1222 = vpop.f32.mrb[0].mxu0
        %v1223 = vadd.f32 %v997, %v1222
        %v1224 = vpop.f32.mrb[0].mxu0
        %v1225 = vadd.f32 %v1001, %v1224
        %1226 = vmatprep.mubr.bf16.mxu0 0
        %1227 = vmatmul.mubr.bf16.gmra.mrb[0].mxu0 %v954
        %v1228 = vpop.f32.mrb[0].mxu0
        %v1229 = vadd.f32 %v997, %v1228
        %v1230 = vpop.f32.mrb[0].mxu0
        %v1231 = vadd.f32 %v1001, %v1230
        %v1232 = vpop.f32.mrb[0].mxu0
        %v1233 = vadd.f32 %v997, %v1232
        %v1234 = vpop.f32.mrb[0].mxu0
        %v1235 = vadd.f32 %v1001, %v1234
        %1236 = vmatprep.mubr.bf16.mxu0 0
        %1237 = vmatmul.mubr.bf16.gmra.mrb[0].mxu0 %v955
        %v1238 = vpop.f32.mrb[0].mxu0
        %v1239 = vadd.f32 %v997, %v1238
        %v1240 = vpop.f32.mrb[0].mxu0
        %v1241 = vadd.f32 %v1001, %v1240
        %v1242 = vpop.f32.mrb[0].mxu0
        %v1243 = vadd.f32 %v997, %v1242
        %v1244 = vpop.f32.mrb[0].mxu0
        %v1245 = vadd.f32 %v1001, %v1244
        %1246 = vmatprep.mubr.bf16.mxu0 0
        %1247 = vmatmul.mubr.bf16.gmra.mrb[0].mxu0 %v956
        %v1248 = vpop.f32.mrb[0].mxu0
        %v1249 = vadd.f32 %v997, %v1248
        %v1250 = vpop.f32.mrb[0].mxu0
        %v1251 = vadd.f32 %v1001, %v1250
        %v1252 = vpop.f32.mrb[0].mxu0
        %v1253 = vadd.f32 %v997, %v1252
        %v1254 = vpop.f32.mrb[0].mxu0
        %v1255 = vadd.f32 %v1001, %v1254
        %1256 = vmatprep.mubr.bf16.mxu0 0
        %1257 = vmatmul.mubr.bf16.gmra.mrb[0].mxu0 %v957
        %v1258 = vpop.f32.mrb[0].mxu0
        %v1259 = vadd.f32 %v997, %v1258
        %v1260 = vpop.f32.mrb[0].mxu0
        %v1261 = vadd.f32 %v1001, %v1260
        %v1262 = vpop.f32.mrb[0].mxu0
        %v1263 = vadd.f32 %v997, %v1262
        %v1264 = vpop.f32.mrb[0].mxu0
        %v1265 = vadd.f32 %v1001, %v1264
        %1266 = vmatprep.mubr.bf16.mxu0 0
        %1267 = vmatmul.mubr.bf16.gmra.mrb[0].mxu0 %v958
        %v1268 = vpop.f32.mrb[0].mxu0
        %v1269 = vadd.f32 %v997, %v1268
        %v1270 = vpop.f32.mrb[0].mxu0
        %v1271 = vadd.f32 %v1001, %v1270
        %v1272 = vpop.f32.mrb[0].mxu0
        %v1273 = vadd.f32 %v997, %v1272
        %v1274 = vpop.f32.mrb[0].mxu0
        %v1275 = vadd.f32 %v1001, %v1274
        %1276 = vmatprep.mubr.bf16.mxu0 0
        %1277 = vmatmul.mubr.bf16.gmra.mrb[0].mxu0 %v959
        %v1278 = vpop.f32.mrb[0].mxu0
        %v1279 = vadd.f32 %v997, %v1278
        %v1280 = vpop.f32.mrb[0].mxu0
        %v1281 = vadd.f32 %v1001, %v1280
        %v1282 = vpop.f32.mrb[0].mxu0
        %v1283 = vadd.f32 %v997, %v1282
        %v1284 = vpop.f32.mrb[0].mxu0
        %v1285 = vadd.f32 %v1001, %v1284
        %1286 = vdwg.mxu0
        %1287 = vmatprep.subr.bf16.mxu0 %v1113
        %1288 = vmatpush1.bf16.msra.mxu0 %v1112
        %1289 = vmatprep.subr.bf16.mxu0 %v1117
        %1290 = vmatpush1.bf16.msra.mxu0 %v1116
        %1291 = vmatprep.subr.bf16.mxu0 %v1121
        %1292 = vmatpush1.bf16.msra.mxu0 %v1120
        %1293 = vmatprep.subr.bf16.mxu0 %v1125
        %1294 = vmatpush1.bf16.msra.mxu0 %v1124
        %1295 = vmatprep.subr.bf16.mxu0 %v1129
        %1296 = vmatpush1.bf16.msra.mxu0 %v1128
        %1297 = vmatprep.subr.bf16.mxu0 %v1133
        %1298 = vmatpush1.bf16.msra.mxu0 %v1132
        %1299 = vmatprep.subr.bf16.mxu0 %v1137
        %1300 = vmatpush1.bf16.msra.mxu0 %v1136
        %1301 = vmatprep.subr.bf16.mxu0 %v1141
        %1302 = vmatpush1.bf16.msra.mxu0 %v1140
        %1303 = vmatprep.subr.bf16.mxu0 0
        %1304 = vmatpush1.bf16.msra.mxu0 0
        %1305 = vmatprep.subr.bf16.mxu0 0
        %1306 = vmatpush1.bf16.msra.mxu0 0
        %1307 = vmatprep.subr.bf16.mxu0 0
        %1308 = vmatpush1.bf16.msra.mxu0 0
        %1309 = vmatprep.subr.bf16.mxu0 0
        %1310 = vmatpush1.bf16.msra.mxu0 0
        %1311 = vmatprep.subr.bf16.mxu0 0
        %1312 = vmatpush1.bf16.msra.mxu0 0
        %1313 = vmatprep.subr.bf16.mxu0 0
        %1314 = vmatpush1.bf16.msra.mxu0 0
        %1315 = vmatprep.subr.bf16.mxu0 0
        %1316 = vmatpush1.bf16.msra.mxu0 0
        %1317 = vmatprep.subr.bf16.mxu0 0
        %1318 = vmatpush1.bf16.msra.mxu0 0
        %1319 = vmatprep.mubr.bf16.mxu0 0
        %1320 = vmatmul.mubr.bf16.gmra.mrb[0].mxu0 %v952
        %v1321 = vpop.f32.mrb[0].mxu0
        %v1322 = vadd.f32 %v1005, %v1321
        %v1323 = vpop.f32.mrb[0].mxu0
        %v1324 = vadd.f32 %v1009, %v1323
        %v1325 = vpop.f32.mrb[0].mxu0
        %v1326 = vadd.f32 %v1005, %v1325
        %v1327 = vpop.f32.mrb[0].mxu0
        %v1328 = vadd.f32 %v1009, %v1327
        %1329 = vmatprep.mubr.bf16.mxu0 0
        %1330 = vmatmul.mubr.bf16.gmra.mrb[0].mxu0 %v953
        %v1331 = vpop.f32.mrb[0].mxu0
        %v1332 = vadd.f32 %v1005, %v1331
        %v1333 = vpop.f32.mrb[0].mxu0
        %v1334 = vadd.f32 %v1009, %v1333
        %v1335 = vpop.f32.mrb[0].mxu0
        %v1336 = vadd.f32 %v1005, %v1335
        %v1337 = vpop.f32.mrb[0].mxu0
        %v1338 = vadd.f32 %v1009, %v1337
        %1339 = vmatprep.mubr.bf16.mxu0 0
        %1340 = vmatmul.mubr.bf16.gmra.mrb[0].mxu0 %v954
        %v1341 = vpop.f32.mrb[0].mxu0
        %v1342 = vadd.f32 %v1005, %v1341
        %v1343 = vpop.f32.mrb[0].mxu0
        %v1344 = vadd.f32 %v1009, %v1343
        %v1345 = vpop.f32.mrb[0].mxu0
        %v1346 = vadd.f32 %v1005, %v1345
        %v1347 = vpop.f32.mrb[0].mxu0
        %v1348 = vadd.f32 %v1009, %v1347
        %1349 = vmatprep.mubr.bf16.mxu0 0
        %1350 = vmatmul.mubr.bf16.gmra.mrb[0].mxu0 %v955
        %v1351 = vpop.f32.mrb[0].mxu0
        %v1352 = vadd.f32 %v1005, %v1351
        %v1353 = vpop.f32.mrb[0].mxu0
        %v1354 = vadd.f32 %v1009, %v1353
        %v1355 = vpop.f32.mrb[0].mxu0
        %v1356 = vadd.f32 %v1005, %v1355
        %v1357 = vpop.f32.mrb[0].mxu0
        %v1358 = vadd.f32 %v1009, %v1357
        %1359 = vmatprep.mubr.bf16.mxu0 0
        %1360 = vmatmul.mubr.bf16.gmra.mrb[0].mxu0 %v956
        %v1361 = vpop.f32.mrb[0].mxu0
        %v1362 = vadd.f32 %v1005, %v1361
        %v1363 = vpop.f32.mrb[0].mxu0
        %v1364 = vadd.f32 %v1009, %v1363
        %v1365 = vpop.f32.mrb[0].mxu0
        %v1366 = vadd.f32 %v1005, %v1365
        %v1367 = vpop.f32.mrb[0].mxu0
        %v1368 = vadd.f32 %v1009, %v1367
        %1369 = vmatprep.mubr.bf16.mxu0 0
        %1370 = vmatmul.mubr.bf16.gmra.mrb[0].mxu0 %v957
        %v1371 = vpop.f32.mrb[0].mxu0
        %v1372 = vadd.f32 %v1005, %v1371
        %v1373 = vpop.f32.mrb[0].mxu0
        %v1374 = vadd.f32 %v1009, %v1373
        %v1375 = vpop.f32.mrb[0].mxu0
        %v1376 = vadd.f32 %v1005, %v1375
        %v1377 = vpop.f32.mrb[0].mxu0
        %v1378 = vadd.f32 %v1009, %v1377
        %1379 = vmatprep.mubr.bf16.mxu0 0
        %1380 = vmatmul.mubr.bf16.gmra.mrb[0].mxu0 %v958
        %v1381 = vpop.f32.mrb[0].mxu0
        %v1382 = vadd.f32 %v1005, %v1381
        %v1383 = vpop.f32.mrb[0].mxu0
        %v1384 = vadd.f32 %v1009, %v1383
        %v1385 = vpop.f32.mrb[0].mxu0
        %v1386 = vadd.f32 %v1005, %v1385
        %v1387 = vpop.f32.mrb[0].mxu0
        %v1388 = vadd.f32 %v1009, %v1387
        %1389 = vmatprep.mubr.bf16.mxu0 0
        %1390 = vmatmul.mubr.bf16.gmra.mrb[0].mxu0 %v959
        %v1391 = vpop.f32.mrb[0].mxu0
        %v1392 = vadd.f32 %v1005, %v1391
        %v1393 = vpop.f32.mrb[0].mxu0
        %v1394 = vadd.f32 %v1009, %v1393
        %v1395 = vpop.f32.mrb[0].mxu0
        %v1396 = vadd.f32 %v1005, %v1395
        %v1397 = vpop.f32.mrb[0].mxu0
        %v1398 = vadd.f32 %v1009, %v1397
        %1399 = vdwg.mxu0
        %1400 = vst [vmem:[%s372] sm:$0xff] %v1209
        %1401 = vst [vmem:[%s372 + $0x8] sm:$0xff] %v1211
        %1402 = vst [vmem:[%s372 + $0x10] sm:$0xff] %v1322
        %1403 = vst [vmem:[%s372 + $0x18] sm:$0xff] %v1324
        %1404 = vst [vmem:[%s372 + $0x20] sm:$0xff] %v1213
        %1405 = vst [vmem:[%s372 + $0x28] sm:$0xff] %v1215
        %1406 = vst [vmem:[%s372 + $0x30] sm:$0xff] %v1326
        %1407 = vst [vmem:[%s372 + $0x38] sm:$0xff] %v1328
        %1408 = vst [vmem:[%s372 + $0x40] sm:$0xff] %v1219
        %1409 = vst [vmem:[%s372 + $0x48] sm:$0xff] %v1221
        %1410 = vst [vmem:[%s372 + $0x50] sm:$0xff] %v1332
        %1411 = vst [vmem:[%s372 + $0x58] sm:$0xff] %v1334
        %1412 = vst [vmem:[%s372 + $0x60] sm:$0xff] %v1223
        %1413 = vst [vmem:[%s372 + $0x68] sm:$0xff] %v1225
        %1414 = vst [vmem:[%s372 + $0x70] sm:$0xff] %v1336
        %1415 = vst [vmem:[%s372 + $0x78] sm:$0xff] %v1338
        %1416 = vst [vmem:[%s372 + $0x80] sm:$0xff] %v1229
        %1417 = vst [vmem:[%s372 + $0x88] sm:$0xff] %v1231
        %1418 = vst [vmem:[%s372 + $0x90] sm:$0xff] %v1342
        %1419 = vst [vmem:[%s372 + $0x98] sm:$0xff] %v1344
        %1420 = vst [vmem:[%s372 + $0xa0] sm:$0xff] %v1233
        %1421 = vst [vmem:[%s372 + $0xa8] sm:$0xff] %v1235
        %1422 = vst [vmem:[%s372 + $0xb0] sm:$0xff] %v1346
        %1423 = vst [vmem:[%s372 + $0xb8] sm:$0xff] %v1348
        %1424 = vst [vmem:[%s372 + $0xc0] sm:$0xff] %v1239
        %1425 = vst [vmem:[%s372 + $0xc8] sm:$0xff] %v1241
        %1426 = vst [vmem:[%s372 + $0xd0] sm:$0xff] %v1352
        %1427 = vst [vmem:[%s372 + $0xd8] sm:$0xff] %v1354
        %1428 = vst [vmem:[%s372 + $0xe0] sm:$0xff] %v1243
        %1429 = vst [vmem:[%s372 + $0xe8] sm:$0xff] %v1245
        %1430 = vst [vmem:[%s372 + $0xf0] sm:$0xff] %v1356
        %1431 = vst [vmem:[%s372 + $0xf8] sm:$0xff] %v1358
        %1432 = vst [vmem:[%s372 + $0x100] sm:$0xff] %v1249
        %1433 = vst [vmem:[%s372 + $0x108] sm:$0xff] %v1251
        %1434 = vst [vmem:[%s372 + $0x110] sm:$0xff] %v1362
        %1435 = vst [vmem:[%s372 + $0x118] sm:$0xff] %v1364
        %1436 = vst [vmem:[%s372 + $0x120] sm:$0xff] %v1253
        %1437 = vst [vmem:[%s372 + $0x128] sm:$0xff] %v1255
        %1438 = vst [vmem:[%s372 + $0x130] sm:$0xff] %v1366
        %1439 = vst [vmem:[%s372 + $0x138] sm:$0xff] %v1368
        %1440 = vst [vmem:[%s372 + $0x140] sm:$0xff] %v1259
        %1441 = vst [vmem:[%s372 + $0x148] sm:$0xff] %v1261
        %1442 = vst [vmem:[%s372 + $0x150] sm:$0xff] %v1372
        %1443 = vst [vmem:[%s372 + $0x158] sm:$0xff] %v1374
        %1444 = vst [vmem:[%s372 + $0x160] sm:$0xff] %v1263
        %1445 = vst [vmem:[%s372 + $0x168] sm:$0xff] %v1265
        %1446 = vst [vmem:[%s372 + $0x170] sm:$0xff] %v1376
        %1447 = vst [vmem:[%s372 + $0x178] sm:$0xff] %v1378
        %1448 = vst [vmem:[%s372 + $0x180] sm:$0xff] %v1269
        %1449 = vst [vmem:[%s372 + $0x188] sm:$0xff] %v1271
        %1450 = vst [vmem:[%s372 + $0x190] sm:$0xff] %v1382
        %1451 = vst [vmem:[%s372 + $0x198] sm:$0xff] %v1384
        %1452 = vst [vmem:[%s372 + $0x1a0] sm:$0xff] %v1273
        %1453 = vst [vmem:[%s372 + $0x1a8] sm:$0xff] %v1275
        %1454 = vst [vmem:[%s372 + $0x1b0] sm:$0xff] %v1386
        %1455 = vst [vmem:[%s372 + $0x1b8] sm:$0xff] %v1388
        %1456 = vst [vmem:[%s372 + $0x1c0] sm:$0xff] %v1279
        %1457 = vst [vmem:[%s372 + $0x1c8] sm:$0xff] %v1281
        %1458 = vst [vmem:[%s372 + $0x1d0] sm:$0xff] %v1392
        %1459 = vst [vmem:[%s372 + $0x1d8] sm:$0xff] %v1394
        %1460 = vst [vmem:[%s372 + $0x1e0] sm:$0xff] %v1283
        %1461 = vst [vmem:[%s372 + $0x1e8] sm:$0xff] %v1285
        %1462 = vst [vmem:[%s372 + $0x1f0] sm:$0xff] %v1396
        %1463 = vst [vmem:[%s372 + $0x1f8] sm:$0xff] %v1398
        %s1464 = sand.u32 %s191, 1
        %s1465 = scalar_lea.sflag [#allocation4], %s1464
        %s1466 = sand.u32 %s191, 1
        %s1467 = smul.addr %s1466, 512
        %s1468 = scalar_lea.vmem [#allocation10], %s1467
        %s1469 = sand.u32 %s217, 1
        %s1470 = scalar_lea.sflag [#allocation12], %s1469
        %s1471 = sand.u32 %s217, 1
        %s1472 = smul.addr %s1471, 128
        %s1473 = scalar_lea.vmem [#allocation11], %s1472
        // Predicated region
        $region65: #{tpu_custom_call.1} parent=47 // pred_check
          %p1474 = pneg %p201
        $region66: #{tpu_custom_call.1} parent=47 // pred_check_branch
          %1476 = sbr.rel (%p1474) target = $region68
        $region67: #{tpu_custom_call.1} parent=47 // pred_region
          %s1477 = smul.u32 16, %s31
          %s1479 = ssub.s32 8192, 8192
          %1480 = vsyncadd %s1465, %s1479
          %s1481 = smul.addr %s1477, 4
          %s1482 = smul.addr %s1481, 128
          %s1483 = scalar_lea.hbm %s7, %s1482
          %s1484 = sshll.u32 %s1468, 4
          %s1485 = int_to_ptr.vmem [resolvable:$true] %s1484
          %1490 = dma.vmem_to_hbm [thread:$0]  %s1485, 8192, %s1483, %s1465, 512, 512, 32
        $region68: #{tpu_custom_call.1} parent=47 // pred_fallthru
          _
        // Predicated region
        $region69: #{tpu_custom_call.1} parent=47 // pred_check
          %p1491 = pneg %p227
        $region70: #{tpu_custom_call.1} parent=47 // pred_check_branch
          %1493 = sbr.rel (%p1491) target = $region72
        $region71: #{tpu_custom_call.1} parent=47 // pred_region
          %s1494 = smul.u32 16, %s31
          %s1496 = ssub.s32 2048, 2048
          %1497 = vsyncadd %s1470, %s1496
          %s1498 = smul.addr %s1494, 128
          %s1499 = scalar_lea.hbm %s8, %s1498
          %s1500 = sshll.u32 %s1473, 4
          %s1501 = int_to_ptr.vmem [resolvable:$true] %s1500
          %1506 = dma.vmem_to_hbm [thread:$0]  %s1501, 2048, %s1499, %s1470, 128, 128, 8
        $region72: #{tpu_custom_call.1} parent=47 // pred_fallthru
          _
      $region48: #{tpu_custom_call.1} parent=5 // pred_fallthru
        _
      %p1507 = scmp.le.s32.totalorder 2, %s26
      // Predicated region
      $region73: #{tpu_custom_call.1} parent=5 // pred_check
        %p1508 = pneg %p1507
      $region74: #{tpu_custom_call.1} parent=5 // pred_check_branch
        %1510 = sbr.rel (%p1508) target = $region76
      $region75: #{tpu_custom_call.1} parent=5 // pred_region
        %s1511 = ssub.s32 %s26, 2
        // Predicated region
        $region77: #{tpu_custom_call.1} parent=75 // pred_check
          %p1512 = pneg %p207
        $region78: #{tpu_custom_call.1} parent=75 // pred_check_branch
          %1514 = sbr.rel (%p1512) target = $region80
        $region79: #{tpu_custom_call.1} parent=75 // pred_region
          %s1515 = sand.u32 %s192, 1
          %s1516 = scalar_lea.sflag [#allocation4], %s1515
          %s1517 = sand.u32 %s192, 1
          %s1518 = smul.addr %s1517, 512
          %s1519 = scalar_lea.vmem [#allocation10], %s1518
          %1520 = dma.done %s1516, 8192
        $region80: #{tpu_custom_call.1} parent=75 // pred_fallthru
          _
        // Predicated region
        $region81: #{tpu_custom_call.1} parent=75 // pred_check
          %p1521 = pneg %p233
        $region82: #{tpu_custom_call.1} parent=75 // pred_check_branch
          %1523 = sbr.rel (%p1521) target = $region84
        $region83: #{tpu_custom_call.1} parent=75 // pred_region
          %s1524 = sand.u32 %s218, 1
          %s1525 = scalar_lea.sflag [#allocation12], %s1524
          %s1526 = sand.u32 %s218, 1
          %s1527 = smul.addr %s1526, 128
          %s1528 = scalar_lea.vmem [#allocation11], %s1527
          %1529 = dma.done %s1525, 2048
        $region84: #{tpu_custom_call.1} parent=75 // pred_fallthru
          _
      $region76: #{tpu_custom_call.1} parent=5 // pred_fallthru
        _
    $region6: #{tpu_custom_call.1} parent=1 // loop_footer
      %s30 = sadd.s32 1, %s26
    $region7: #{tpu_custom_call.1} parent=1 // loop_footer_branch
      %25 = sbr.rel target = $region3
    $region8: #{tpu_custom_call.1} parent=1 // loop_exit
      _
    %1530 = vsyncpa [#allocation3], 1
    %s1531 = scalar_lea.sflag [#allocation3], 1
    %1532 = vsyncpa %s1531, 1
    %1533 = vsyncpa [#allocation6], 1
    %1534 = vsyncpa [#allocation9], 1
    %1535 = vsyncpa [#allocation4], 1
    %s1536 = scalar_lea.sflag [#allocation4], 1
    %1537 = vsyncpa %s1536, 1
    %1538 = vsyncpa [#allocation12], 1
    %s1539 = scalar_lea.sflag [#allocation12], 1
    %1540 = vsyncpa %s1539, 1

</llo_original>
